<compile_context>
chip_gen: v7x
topology: tpu7x:2x2x1
jax: 0.10.0
libtpu: 0.0.40
codegen_flags: <defaults>
</compile_context>

<pallas_src>
import functools

import jax
import jax.numpy as jnp
from jax import lax
from jax.experimental import pallas as pl
from jax.experimental.pallas import tpu as pltpu


def _round_up(x, m):
    return -(-x // m) * m


# ----------------------------------------------------------------------------
# Kernels A / C: row-tiled matmul (+ bias), optional log-softmax.
# ----------------------------------------------------------------------------
def _rowwise_matmul_kernel(x_ref, w_ref, b_ref, o_ref, *, log_softmax):
    acc = (jnp.dot(x_ref[...], w_ref[...], preferred_element_type=jnp.float32)
           + b_ref[...])                                     # (TM, N) f32
    if log_softmax:
        m = jnp.max(acc, axis=-1, keepdims=True)
        s = acc - m
        acc = s - jnp.log(jnp.sum(jnp.exp(s), axis=-1, keepdims=True))
    o_ref[...] = acc.astype(o_ref.dtype)


def rowwise_matmul_pallas(x, w, b, *, log_softmax=False,
                          out_dtype=jnp.float32, tile_rows=256):
    """out = (log_softmax?)(x @ w + b), row-tiled.  x: (N, K), w: (K, M)."""
    n, k = x.shape
    m_out = w.shape[1]
    n_pad = _round_up(max(n, 1), tile_rows)
    x_p = jnp.zeros((n_pad, k), x.dtype).at[:n].set(x)

    grid_spec = pltpu.PrefetchScalarGridSpec(
        num_scalar_prefetch=0,
        grid=(n_pad // tile_rows,),
        in_specs=[
            pl.BlockSpec((tile_rows, k), lambda i: (i, 0)),
            pl.BlockSpec((k, m_out), lambda i: (0, 0)),     # resident weight
            pl.BlockSpec((1, m_out), lambda i: (0, 0)),     # resident bias
        ],
        out_specs=pl.BlockSpec((tile_rows, m_out), lambda i: (i, 0)),
    )
    out = pl.pallas_call(
        functools.partial(_rowwise_matmul_kernel, log_softmax=log_softmax),
        out_shape=jax.ShapeDtypeStruct((n_pad, m_out), out_dtype),
        grid_spec=grid_spec,
        compiler_params=pltpu.CompilerParams(
            dimension_semantics=("parallel",),
            vmem_limit_bytes=32 * 1024 * 1024),
    )(x_p, w, b)
    return out[:n]


# ----------------------------------------------------------------------------
# Kernel B: LSTM recurrence.  One grid step = K time steps of the full batch.
# NOTE: the single grid axis is the time recurrence and MUST stay sequential
# ("arbitrary"); the persistent h/c scratch + @pl.when(ti == 0) init rely on
# grid iterations executing in order on one core.
# ----------------------------------------------------------------------------
def _lstm_seq_kernel(
    preg_ref,                               # (K, TB, 8H) f32: x@W_ih0 + b0
    h00_ref, c00_ref, h01_ref, c01_ref,     # (TB, 2H) f32: initial states
    whh0_ref, wih1_ref, whh1_ref,           # (2H, 8H) bf16: recurrent weights
    b1_ref,                                 # (1, 8H)  f32: layer-1 bias
    o_ref,                                  # (K, TB, 2H) bf16: layer-1 hidden
    h0_scr, c0_scr, h1_scr, c1_scr,         # (TB, 2H) f32: running state
):
    ti = pl.program_id(0)
    tb, two_h = h0_scr.shape
    eight_h = 4 * two_h
    k_steps = preg_ref.shape[0]
    bf16 = jnp.bfloat16

    @pl.when(ti == 0)
    def _init():
        h0_scr[...] = h00_ref[...]
        c0_scr[...] = c00_ref[...]
        h1_scr[...] = h01_ref[...]
        c1_scr[...] = c01_ref[...]

    whh0 = whh0_ref[...]
    wih1 = wih1_ref[...]
    whh1 = whh1_ref[...]
    # Hoist the bias broadcast out of the unrolled loop (JAX does not CSE
    # broadcast_in_dim).  Layer-0 bias is already folded into the pre-gates.
    b1 = jnp.broadcast_to(b1_ref[...], (tb, eight_h))

    def gates_to_state(g, c_prev):
        i_g = jax.nn.sigmoid(g[:, 0 * two_h:1 * two_h])
        f_g = jax.nn.sigmoid(g[:, 1 * two_h:2 * two_h])
        g_g = jnp.tanh(g[:, 2 * two_h:3 * two_h])
        o_g = jax.nn.sigmoid(g[:, 3 * two_h:4 * two_h])
        c_new = f_g * c_prev + i_g * g_g
        return o_g * jnp.tanh(c_new), c_new

    def step(k, carry):
        h_0, c_0, h_1, c_1 = carry
        # Layer 0: input contribution precomputed; only the recurrent dot here.
        g0 = preg_ref[k] + jnp.dot(h_0.astype(bf16), whh0,
                                   preferred_element_type=jnp.float32)
        h0n, c0n = gates_to_state(g0, c_0)
        # Layer 1: two accumulating dots instead of a lane-dim concat.
        g1 = (jnp.dot(h0n.astype(bf16), wih1,
                      preferred_element_type=jnp.float32)
              + jnp.dot(h_1.astype(bf16), whh1,
                        preferred_element_type=jnp.float32)
              + b1)
        h1n, c1n = gates_to_state(g1, c_1)
        o_ref[k] = h1n.astype(o_ref.dtype)
        return (h0n, c0n, h1n, c1n)

    carry0 = (h0_scr[...], c0_scr[...], h1_scr[...], c1_scr[...])
    h0f, c0f, h1f, c1f = lax.fori_loop(0, k_steps, step, carry0, unroll=True)
    h0_scr[...] = h0f
    c0_scr[...] = c0f
    h1_scr[...] = h1f
    c1_scr[...] = c1f


def lstm_decoder_states_pallas(pre_g0, h0, c0, params, *, k_steps=8):
    """Run T-1 teacher-forced LSTM steps given precomputed layer-0 input gates.
    pre_g0: (steps, B, 8H) f32, time-major.  Returns (steps, B, 2H) bf16."""
    steps, b, eight_h = pre_g0.shape
    two_h = h0.shape[-1]
    assert eight_h == 4 * two_h
    f32 = jnp.float32

    # Single batch tile (no megacore split: the recurrence is latency-bound;
    # splitting only shrinks the MXU M dim and duplicates weight traffic).
    b_pad = _round_up(b, 16)
    nt = -(-steps // k_steps)
    t_pad = nt * k_steps

    pg = jnp.zeros((t_pad, b_pad, eight_h), f32).at[:steps, :b].set(pre_g0)

    def pad_state(s):
        return jnp.zeros((b_pad, two_h), f32).at[:b].set(s.astype(f32))

    h00, h01 = pad_state(h0[0]), pad_state(h0[1])
    c00, c01 = pad_state(c0[0]), pad_state(c0[1])

    def const2d(shape):
        return pl.BlockSpec(shape, lambda ti: (0, 0))

    grid_spec = pltpu.PrefetchScalarGridSpec(
        num_scalar_prefetch=0,
        grid=(nt,),
        in_specs=[
            pl.BlockSpec((k_steps, b_pad, eight_h), lambda ti: (ti, 0, 0)),
            const2d((b_pad, two_h)), const2d((b_pad, two_h)),   # h00, c00
            const2d((b_pad, two_h)), const2d((b_pad, two_h)),   # h01, c01
            const2d((two_h, eight_h)),                          # W_hh layer 0
            const2d((two_h, eight_h)),                          # W_ih layer 1
            const2d((two_h, eight_h)),                          # W_hh layer 1
            const2d((1, eight_h)),                              # b1
        ],
        out_specs=pl.BlockSpec((k_steps, b_pad, two_h), lambda ti: (ti, 0, 0)),
        scratch_shapes=[pltpu.VMEM((b_pad, two_h), f32)] * 4,
    )
    h1_seq = pl.pallas_call(
        _lstm_seq_kernel,
        out_shape=jax.ShapeDtypeStruct((t_pad, b_pad, two_h), jnp.bfloat16),
        grid_spec=grid_spec,
        compiler_params=pltpu.CompilerParams(
            dimension_semantics=("arbitrary",),        # sequential recurrence
            vmem_limit_bytes=32 * 1024 * 1024),
    )(pg, h00, c00, h01, c01,
      params["whh0"], params["wih1"], params["whh1"], params["b1"])

    return h1_seq[:steps, :b]


# ----------------------------------------------------------------------------
# Parameter preparation (PyTorch layout -> kernel layout) and full forward.
# ----------------------------------------------------------------------------
def prepare_params(raw):
    """raw: PyTorch-layout Decoder weights.  Transpose / cast once."""
    bf16, f32 = jnp.bfloat16, jnp.float32
    return {
        "embedding": raw["embedding"].astype(f32),
        "wih0": raw["weight_ih_l0"].T.astype(bf16),          # (H,  8H)
        "whh0": raw["weight_hh_l0"].T.astype(bf16),          # (2H, 8H)
        "b0": (raw["bias_ih_l0"] + raw["bias_hh_l0"]).reshape(1, -1).astype(f32),
        "wih1": raw["weight_ih_l1"].T.astype(bf16),          # (2H, 8H)
        "whh1": raw["weight_hh_l1"].T.astype(bf16),          # (2H, 8H)
        "b1": (raw["bias_ih_l1"] + raw["bias_hh_l1"]).reshape(1, -1).astype(f32),
        "wout_t": raw["out_weight"].T.astype(bf16),          # (2H, V)
        "bout": raw["out_bias"].reshape(1, -1).astype(f32),  # (1, V)
    }


def decoder_forward(input_batch, target_batch, context_h, context_c, params,
                    sos_id, *, k_steps=8):
    """Teacher-forced Decoder.forward (mode='train', ratio=1.0) -> (B, T, V)."""
    del input_batch  # only its batch size is used in the reference module
    b, t_len = target_batch.shape
    v = params["wout_t"].shape[1]
    h = params["embedding"].shape[1]
    assert t_len >= 2
    steps = t_len - 1

    # hidden = [cat(each[0::2], each[1::2], dim=2) for each in context]
    h0 = jnp.concatenate([context_h[0::2], context_h[1::2]], axis=2)
    c0 = jnp.concatenate([context_c[0::2], context_c[1::2]], axis=2)

    # embedding lookup of the T-1 teacher tokens (XLA glue), time-major
    tokens = target_batch[:, :steps]                          # (B, T-1)
    x_emb = jnp.transpose(params["embedding"][tokens], (1, 0, 2))  # (T-1,B,H)

    # hot path 0: time-parallel layer-0 input gates (hoisted off the chain)
    pre_g0 = rowwise_matmul_pallas(
        x_emb.reshape(steps * b, h).astype(jnp.bfloat16),
        params["wih0"], params["b0"],
        log_softmax=False, out_dtype=jnp.float32, tile_rows=256)
    pre_g0 = pre_g0.reshape(steps, b, -1)

    # hot path 1: serial recurrence -> layer-1 hidden sequence (bf16)
    h1_seq = lstm_decoder_states_pallas(pre_g0, h0, c0, params,
                                        k_steps=k_steps)
    two_h = h1_seq.shape[-1]

    # hot path 2: time-parallel projection + log-softmax
    log_probs = rowwise_matmul_pallas(
        h1_seq.reshape(steps * b, two_h), params["wout_t"], params["bout"],
        log_softmax=True, out_dtype=jnp.float32, tile_rows=256)
    log_probs = log_probs.reshape(steps, b, v)

    # prediction_batch[0] = one-hot(sos) repeated across the batch
    first = jnp.zeros((1, b, v), jnp.float32).at[0, :, sos_id].set(1.0)
    prediction = jnp.concatenate([first, log_probs], axis=0)  # (T, B, V)
    return jnp.transpose(prediction, (1, 0, 2))               # (B, T, V)


# ----------------------------------------------------------------------------
# Pure-JAX reference (scan), mirroring the kernel's precision scheme.
# ----------------------------------------------------------------------------
def _reference_log_probs(x_emb, h0, c0, p):
    bf16 = jnp.bfloat16
    two_h = h0.shape[-1]
    steps, b, h = x_emb.shape

    def dots(a, w):
        return jnp.dot(a.astype(bf16), w, preferred_element_type=jnp.float32)

    pre_g0 = (dots(x_emb.reshape(steps * b, h), p["wih0"])
              .reshape(steps, b, -1) + p["b0"])

    def gates_to_state(g, c_prev):
        i = jax.nn.sigmoid(g[:, :two_h])
        f = jax.nn.sigmoid(g[:, two_h:2 * two_h])
        gg = jnp.tanh(g[:, 2 * two_h:3 * two_h])
        o = jax.nn.sigmoid(g[:, 3 * two_h:])
        c_new = f * c_prev + i * gg
        return o * jnp.tanh(c_new), c_new

    def step(carry, pg):
        h_0, c_0, h_1, c_1 = carry
        g0 = pg + dots(h_0, p["whh0"])
        h0n, c0n = gates_to_state(g0, c_0)
        g1 = dots(h0n, p["wih1"]) + dots(h_1, p["whh1"]) + p["b1"]
        h1n, c1n = gates_to_state(g1, c_1)
        logits = dots(h1n, p["wout_t"]) + p["bout"]
        return (h0n, c0n, h1n, c1n), jax.nn.log_softmax(logits, axis=-1)

    init = (h0[0], c0[0], h0[1], c0[1])
    _, out = lax.scan(step, init, pre_g0)
    return out


if __name__ == "__main__":
    # small but (8,128)-aligned config; num_layers must be 2 for this module
    B, T, H, L, V = 16, 17, 128, 2, 256
    TWO_H = 2 * H
    SOS_ID, EOS_ID, PAD_ID = 1, 2, 0

    key = jax.random.PRNGKey(0)
    ks = jax.random.split(key, 16)

    def normal(k, shape, scale=0.1):
        return scale * jax.random.normal(k, shape, jnp.float32)

    raw = {
        # nn.Embedding(V, hidden_size) with xavier_normal init
        "embedding": normal(ks[0], (V, H), (2.0 / (V + H)) ** 0.5),
        # LSTM(input=H, hidden=2H, num_layers=2) in PyTorch layout
        "weight_ih_l0": normal(ks[1], (4 * TWO_H, H)),
        "weight_hh_l0": normal(ks[2], (4 * TWO_H, TWO_H)),
        "bias_ih_l0": normal(ks[3], (4 * TWO_H,)),
        "bias_hh_l0": normal(ks[4], (4 * TWO_H,)),
        "weight_ih_l1": normal(ks[5], (4 * TWO_H, TWO_H)),
        "weight_hh_l1": normal(ks[6], (4 * TWO_H, TWO_H)),
        "bias_ih_l1": normal(ks[7], (4 * TWO_H,)),
        "bias_hh_l1": normal(ks[8], (4 * TWO_H,)),
        # nn.Linear(2H, V)
        "out_weight": normal(ks[9], (V, TWO_H)),
        "out_bias": normal(ks[10], (V,)),
    }
    params = prepare_params(raw)

    input_batch = jax.random.randint(ks[11], (B, T), 0, V)   # only batch size used
    target_batch = jax.random.randint(ks[12], (B, T), 0, V)
    # bidirectional encoder context (h, c): (num_layers * 2, B, H)
    context_h = normal(ks[13], (2 * L, B, H), 0.5)
    context_c = normal(ks[14], (2 * L, B, H), 0.5)

    out = decoder_forward(input_batch, target_batch, context_h, context_c,
                          params, SOS_ID)
    out = jax.block_until_ready(out)
    assert out.shape == (B, T, V), out.shape

    # verify the Pallas hot path against a pure-JAX scan reference
    h0 = jnp.concatenate([context_h[0::2], context_h[1::2]], axis=2)
    c0 = jnp.concatenate([context_c[0::2], context_c[1::2]], axis=2)
    x_emb = jnp.transpose(params["embedding"][target_batch[:, :T - 1]],
                          (1, 0, 2))
    ref = _reference_log_probs(x_emb, h0, c0, params)         # (T-1, B, V)
    got = jnp.transpose(out, (1, 0, 2))[1:]                   # (T-1, B, V)
    max_err = float(jnp.max(jnp.abs(got - ref)))
    assert max_err < 3e-2, max_err
    # first time step is the SOS one-hot row, as in the PyTorch module
    assert float(out[0, 0, SOS_ID]) == 1.0

    print("KERNEL_OK")
</pallas_src>

<mosaic_0001>
module attributes {stable_mosaic.version = 11 : i64} {
  func.func @_rowwise_matmul_kernel(%arg0: i32, %arg1: memref<256x128xbf16, #tpu.memory_space<vmem>>, %arg2: memref<128x1024xbf16, #tpu.memory_space<vmem>>, %arg3: memref<1x1024xf32, #tpu.memory_space<vmem>>, %arg4: memref<256x1024xf32, #tpu.memory_space<vmem>>) attributes {dimension_semantics = [#tpu.dimension_semantics<parallel>], iteration_bounds = array<i64: 1>, scalar_prefetch = 0 : i64, scratch_operands = 0 : i64, tpu.core_type = #tpu.core_type<tc>, window_params = [{transform_indices = @transform_0, window_bounds = array<i64: 256, 128>}, {pipeline_mode = #tpu.pipeline_mode<synchronous>, transform_indices = @transform_1, window_bounds = array<i64: 128, 1024>}, {pipeline_mode = #tpu.pipeline_mode<synchronous>, transform_indices = @transform_2, window_bounds = array<i64: 1, 1024>}, {transform_indices = @transform_3, window_bounds = array<i64: 256, 1024>}]} {
    %c0 = arith.constant 0 : index
    %c0_0 = arith.constant 0 : index
    %0 = vector.load %arg1[%c0, %c0_0] : memref<256x128xbf16, #tpu.memory_space<vmem>>, vector<256x128xbf16>
    %c0_1 = arith.constant 0 : index
    %c0_2 = arith.constant 0 : index
    %1 = vector.load %arg2[%c0_1, %c0_2] : memref<128x1024xbf16, #tpu.memory_space<vmem>>, vector<128x1024xbf16>
    %cst = arith.constant dense<0.000000e+00> : vector<256x1024xf32>
    %2 = tpu.matmul %0, %1, %cst {dimension_numbers = #tpu.dot_dimension_numbers<[1], [0], [0], [1], [0, 0, 1, 1], [], []>} : vector<256x128xbf16>, vector<128x1024xbf16>, vector<256x1024xf32> -> vector<256x1024xf32>
    %c0_3 = arith.constant 0 : index
    %c0_4 = arith.constant 0 : index
    %3 = vector.load %arg3[%c0_3, %c0_4] : memref<1x1024xf32, #tpu.memory_space<vmem>>, vector<1x1024xf32>
    %4 = vector.broadcast %3 : vector<1x1024xf32> to vector<256x1024xf32>
    %5 = arith.addf %2, %4 : vector<256x1024xf32>
    %c0_5 = arith.constant 0 : index
    %c0_6 = arith.constant 0 : index
    %6 = vector.load %arg4[%c0_5, %c0_6] : memref<256x1024xf32, #tpu.memory_space<vmem>>, vector<256x1024xf32>
    tpu.vector_store %arg4[%c0_5, %c0_6], %5 {strides = array<i32>} : memref<256x1024xf32, #tpu.memory_space<vmem>>, vector<256x1024xf32>,
    return
  }
  func.func @transform_0(%arg0: i32) -> (i32, i32) {
    %c0_i32 = arith.constant 0 : i32
    %c0_i32_0 = arith.constant 0 : i32
    return %arg0, %c0_i32 : i32, i32
  }
  func.func @transform_1(%arg0: i32) -> (i32, i32) {
    %c0_i32 = arith.constant 0 : i32
    %c0_i32_0 = arith.constant 0 : i32
    %c0_i32_1 = arith.constant 0 : i32
    return %c0_i32, %c0_i32_0 : i32, i32
  }
  func.func @transform_2(%arg0: i32) -> (i32, i32) {
    %c0_i32 = arith.constant 0 : i32
    %c0_i32_0 = arith.constant 0 : i32
    %c0_i32_1 = arith.constant 0 : i32
    return %c0_i32, %c0_i32_0 : i32, i32
  }
  func.func @transform_3(%arg0: i32) -> (i32, i32) {
    %c0_i32 = arith.constant 0 : i32
    %c0_i32_0 = arith.constant 0 : i32
    return %arg0, %c0_i32 : i32, i32
  }
}

</mosaic_0001>

<llo_original>
// kernel: tpu_custom_call.1
$region0: #{tpu_custom_call.1}
  #allocation0 [shape = 'u32[]', space=smem, size = 0x4, offset = 0x4, fixed_abs, tag = 'smem constant byte address 0x4 - core index']
  #allocation1 [shape = 'u32[144,128]{1,0:T(1,128)}', space=vmem, size = 0x12000, scoped, tag = 'internal scratch']
  %s0 = inlined_call_operand.hbm [shape: bf16[256,128], index: 0, kind: input, shape index: {}]
  %s1 = inlined_call_operand.hbm [shape: bf16[128,1024], index: 1, kind: input, shape index: {}]
  %s2 = inlined_call_operand.hbm [shape: f32[1,1024], index: 2, kind: input, shape index: {}]
  %s3 = inlined_call_operand.hbm [shape: f32[256,1024], index: 3, kind: output, shape index: {}]
  %s4 = sld [smem:[#allocation0]]
  $region34: #{tpu_custom_call.1} parent=0
    _
  %s6 = ssub.s32 1, %s4
  %s7 = scalar_select 0, %s6, %s4
  $region1: #{tpu_custom_call.1} parent=0
    #allocation2 [shape = 'u8[65536]{0}', space=vmem, size = 0x10000, scoped, tag = 'input window, operand 0, single buffered']
    #allocation3 [shape = 's32[1]{0}', space=sflag, size = 0x4, scoped, tag = 'scoped memory for tpu_custom_call.1']
    #allocation4 [shape = 's32[1]{0}', space=sflag, size = 0x4, scoped, tag = 'scoped memory for tpu_custom_call.1']
    #allocation5 [shape = 'u8[262144]{0}', space=vmem, size = 0x40000, scoped, tag = 'input window, operand 1, single buffered']
    #allocation6 [shape = 's32[1]{0}', space=sflag, size = 0x4, scoped, tag = 'scoped memory for tpu_custom_call.1']
    #allocation7 [shape = 'u8[4096]{0}', space=vmem, size = 0x1000, scoped, tag = 'input window, operand 2, single buffered']
    #allocation8 [shape = 'u8[1048576]{0}', space=vmem, size = 0x100000, scoped, tag = 'output window, operand 0, single buffered']
    %8 = vsyncpa [#allocation3], 0
    %9 = vsyncpa [#allocation6], 0
    %10 = vsyncpa [#allocation4], 0
    // Predicated region
    $region2: #{tpu_custom_call.1} parent=1 // pred_check
      _
    $region3: #{tpu_custom_call.1} parent=1 // pred_check_branch
      %12 = sbr.rel (0) target = $region5
    $region4: #{tpu_custom_call.1} parent=1 // pred_region
      %s14 = ssub.s32 2048, 2048
      %15 = vsyncadd [#allocation3], %s14
      %s16 = sshll.u32 [#allocation2], 4
      %s17 = int_to_ptr.vmem [resolvable:$true] %s16
      %22 = dma.hbm_to_vmem [thread:$0]  %s0, 2048, %s17, [#allocation3], 64, 64, 4
    $region5: #{tpu_custom_call.1} parent=1 // pred_fallthru
      _
    // Predicated region
    $region6: #{tpu_custom_call.1} parent=1 // pred_check
      _
    $region7: #{tpu_custom_call.1} parent=1 // pred_check_branch
      %24 = sbr.rel (0) target = $region9
    $region8: #{tpu_custom_call.1} parent=1 // pred_region
      %s26 = ssub.s32 8192, 8192
      %27 = vsyncadd [#allocation6], %s26
      %s28 = sshll.u32 [#allocation5], 4
      %s29 = int_to_ptr.vmem [resolvable:$true] %s28
      %34 = dma.hbm_to_vmem [thread:$0]  %s1, 8192, %s29, [#allocation6], 512, 512, 32
    $region9: #{tpu_custom_call.1} parent=1 // pred_fallthru
      _
    // Predicated region
    $region10: #{tpu_custom_call.1} parent=1 // pred_check
      _
    $region11: #{tpu_custom_call.1} parent=1 // pred_check_branch
      %36 = sbr.rel (0) target = $region13
    $region12: #{tpu_custom_call.1} parent=1 // pred_region
      %s38 = ssub.s32 128, 128
      %39 = vsyncadd [#allocation6], %s38
      %s41 = sshll.u32 [#allocation7], 4
      %s42 = int_to_ptr.vmem [resolvable:$true] %s41
      %44 = dma.hbm_to_vmem [thread:$0]  %s2, 128, %s42, [#allocation6]
    $region13: #{tpu_custom_call.1} parent=1 // pred_fallthru
      _
    // Predicated region
    $region14: #{tpu_custom_call.1} parent=1 // pred_check
      _
    $region15: #{tpu_custom_call.1} parent=1 // pred_check_branch
      %46 = sbr.rel (0) target = $region17
    $region16: #{tpu_custom_call.1} parent=1 // pred_region
      %47 = dma.done [#allocation3], 2048
    $region17: #{tpu_custom_call.1} parent=1 // pred_fallthru
      _
    // Predicated region
    $region18: #{tpu_custom_call.1} parent=1 // pred_check
      _
    $region19: #{tpu_custom_call.1} parent=1 // pred_check_branch
      %49 = sbr.rel (0) target = $region21
    $region20: #{tpu_custom_call.1} parent=1 // pred_region
      %50 = dma.done [#allocation6], 8192
    $region21: #{tpu_custom_call.1} parent=1 // pred_fallthru
      _
    // Predicated region
    $region22: #{tpu_custom_call.1} parent=1 // pred_check
      _
    $region23: #{tpu_custom_call.1} parent=1 // pred_check_branch
      %52 = sbr.rel (0) target = $region25
    $region24: #{tpu_custom_call.1} parent=1 // pred_region
      %53 = dma.done [#allocation6], 128
    $region25: #{tpu_custom_call.1} parent=1 // pred_fallthru
      _
    %v55 = vld [vmem:[#allocation2] sm:$0xf]
    %v56 = vld [vmem:[#allocation2 + $0x4] sm:$0xf]
    %v57 = vld [vmem:[#allocation2 + $0x8] sm:$0xf]
    %v58 = vld [vmem:[#allocation2 + $0xc] sm:$0xf]
    %v59 = vld [vmem:[#allocation2 + $0x10] sm:$0xf]
    %v60 = vld [vmem:[#allocation2 + $0x14] sm:$0xf]
    %v61 = vld [vmem:[#allocation2 + $0x18] sm:$0xf]
    %v62 = vld [vmem:[#allocation2 + $0x1c] sm:$0xf]
    %v63 = vld [vmem:[#allocation2 + $0x20] sm:$0xf]
    %v64 = vld [vmem:[#allocation2 + $0x24] sm:$0xf]
    %v65 = vld [vmem:[#allocation2 + $0x28] sm:$0xf]
    %v66 = vld [vmem:[#allocation2 + $0x2c] sm:$0xf]
    %v67 = vld [vmem:[#allocation2 + $0x30] sm:$0xf]
    %v68 = vld [vmem:[#allocation2 + $0x34] sm:$0xf]
    %v69 = vld [vmem:[#allocation2 + $0x38] sm:$0xf]
    %v70 = vld [vmem:[#allocation2 + $0x3c] sm:$0xf]
    %v71 = vld [vmem:[#allocation2 + $0x40] sm:$0xf]
    %v72 = vld [vmem:[#allocation2 + $0x44] sm:$0xf]
    %v73 = vld [vmem:[#allocation2 + $0x48] sm:$0xf]
    %v74 = vld [vmem:[#allocation2 + $0x4c] sm:$0xf]
    %v75 = vld [vmem:[#allocation2 + $0x50] sm:$0xf]
    %v76 = vld [vmem:[#allocation2 + $0x54] sm:$0xf]
    %v77 = vld [vmem:[#allocation2 + $0x58] sm:$0xf]
    %v78 = vld [vmem:[#allocation2 + $0x5c] sm:$0xf]
    %v79 = vld [vmem:[#allocation2 + $0x60] sm:$0xf]
    %v80 = vld [vmem:[#allocation2 + $0x64] sm:$0xf]
    %v81 = vld [vmem:[#allocation2 + $0x68] sm:$0xf]
    %v82 = vld [vmem:[#allocation2 + $0x6c] sm:$0xf]
    %v83 = vld [vmem:[#allocation2 + $0x70] sm:$0xf]
    %v84 = vld [vmem:[#allocation2 + $0x74] sm:$0xf]
    %v85 = vld [vmem:[#allocation2 + $0x78] sm:$0xf]
    %v86 = vld [vmem:[#allocation2 + $0x7c] sm:$0xf]
    %v87 = vld [vmem:[#allocation5] sm:$0xff]
    %v88 = vld [vmem:[#allocation5 + $0x8] sm:$0xff]
    %v89 = vld [vmem:[#allocation5 + $0x10] sm:$0xff]
    %v90 = vld [vmem:[#allocation5 + $0x18] sm:$0xff]
    %v91 = vld [vmem:[#allocation5 + $0x20] sm:$0xff]
    %v92 = vld [vmem:[#allocation5 + $0x28] sm:$0xff]
    %v93 = vld [vmem:[#allocation5 + $0x30] sm:$0xff]
    %v94 = vld [vmem:[#allocation5 + $0x38] sm:$0xff]
    %v95 = vld [vmem:[#allocation5 + $0x40] sm:$0xff]
    %v96 = vld [vmem:[#allocation5 + $0x48] sm:$0xff]
    %v97 = vld [vmem:[#allocation5 + $0x50] sm:$0xff]
    %v98 = vld [vmem:[#allocation5 + $0x58] sm:$0xff]
    %v99 = vld [vmem:[#allocation5 + $0x60] sm:$0xff]
    %v100 = vld [vmem:[#allocation5 + $0x68] sm:$0xff]
    %v101 = vld [vmem:[#allocation5 + $0x70] sm:$0xff]
    %v102 = vld [vmem:[#allocation5 + $0x78] sm:$0xff]
    %v103 = vld [vmem:[#allocation5 + $0x80] sm:$0xff]
    %v104 = vld [vmem:[#allocation5 + $0x88] sm:$0xff]
    %v105 = vld [vmem:[#allocation5 + $0x90] sm:$0xff]
    %v106 = vld [vmem:[#allocation5 + $0x98] sm:$0xff]
    %v107 = vld [vmem:[#allocation5 + $0xa0] sm:$0xff]
    %v108 = vld [vmem:[#allocation5 + $0xa8] sm:$0xff]
    %v109 = vld [vmem:[#allocation5 + $0xb0] sm:$0xff]
    %v110 = vld [vmem:[#allocation5 + $0xb8] sm:$0xff]
    %v111 = vld [vmem:[#allocation5 + $0xc0] sm:$0xff]
    %v112 = vld [vmem:[#allocation5 + $0xc8] sm:$0xff]
    %v113 = vld [vmem:[#allocation5 + $0xd0] sm:$0xff]
    %v114 = vld [vmem:[#allocation5 + $0xd8] sm:$0xff]
    %v115 = vld [vmem:[#allocation5 + $0xe0] sm:$0xff]
    %v116 = vld [vmem:[#allocation5 + $0xe8] sm:$0xff]
    %v117 = vld [vmem:[#allocation5 + $0xf0] sm:$0xff]
    %v118 = vld [vmem:[#allocation5 + $0xf8] sm:$0xff]
    %v119 = vld [vmem:[#allocation5 + $0x100] sm:$0xff]
    %v120 = vld [vmem:[#allocation5 + $0x108] sm:$0xff]
    %v121 = vld [vmem:[#allocation5 + $0x110] sm:$0xff]
    %v122 = vld [vmem:[#allocation5 + $0x118] sm:$0xff]
    %v123 = vld [vmem:[#allocation5 + $0x120] sm:$0xff]
    %v124 = vld [vmem:[#allocation5 + $0x128] sm:$0xff]
    %v125 = vld [vmem:[#allocation5 + $0x130] sm:$0xff]
    %v126 = vld [vmem:[#allocation5 + $0x138] sm:$0xff]
    %v127 = vld [vmem:[#allocation5 + $0x140] sm:$0xff]
    %v128 = vld [vmem:[#allocation5 + $0x148] sm:$0xff]
    %v129 = vld [vmem:[#allocation5 + $0x150] sm:$0xff]
    %v130 = vld [vmem:[#allocation5 + $0x158] sm:$0xff]
    %v131 = vld [vmem:[#allocation5 + $0x160] sm:$0xff]
    %v132 = vld [vmem:[#allocation5 + $0x168] sm:$0xff]
    %v133 = vld [vmem:[#allocation5 + $0x170] sm:$0xff]
    %v134 = vld [vmem:[#allocation5 + $0x178] sm:$0xff]
    %v135 = vld [vmem:[#allocation5 + $0x180] sm:$0xff]
    %v136 = vld [vmem:[#allocation5 + $0x188] sm:$0xff]
    %v137 = vld [vmem:[#allocation5 + $0x190] sm:$0xff]
    %v138 = vld [vmem:[#allocation5 + $0x198] sm:$0xff]
    %v139 = vld [vmem:[#allocation5 + $0x1a0] sm:$0xff]
    %v140 = vld [vmem:[#allocation5 + $0x1a8] sm:$0xff]
    %v141 = vld [vmem:[#allocation5 + $0x1b0] sm:$0xff]
    %v142 = vld [vmem:[#allocation5 + $0x1b8] sm:$0xff]
    %v143 = vld [vmem:[#allocation5 + $0x1c0] sm:$0xff]
    %v144 = vld [vmem:[#allocation5 + $0x1c8] sm:$0xff]
    %v145 = vld [vmem:[#allocation5 + $0x1d0] sm:$0xff]
    %v146 = vld [vmem:[#allocation5 + $0x1d8] sm:$0xff]
    %v147 = vld [vmem:[#allocation5 + $0x1e0] sm:$0xff]
    %v148 = vld [vmem:[#allocation5 + $0x1e8] sm:$0xff]
    %v149 = vld [vmem:[#allocation5 + $0x1f0] sm:$0xff]
    %v150 = vld [vmem:[#allocation5 + $0x1f8] sm:$0xff]
    %v151 = vld [vmem:[#allocation7] sm:$0xff]
    %v153 = vlaneseq
    %v154 = vshrl.u32 %v153, 7
    %v155 = vsub.s32 0, %v154
    %v156 = vrot.slane %v151, %v155
    %v157 = vlaneseq
    %v158 = vshrl.u32 %v157, 7
    %v159 = vsub.s32 1, %v158
    %v160 = vrot.slane %v151, %v159
    %v161 = vlaneseq
    %v162 = vshrl.u32 %v161, 7
    %v163 = vsub.s32 2, %v162
    %v164 = vrot.slane %v151, %v163
    %v165 = vlaneseq
    %v166 = vshrl.u32 %v165, 7
    %v167 = vsub.s32 3, %v166
    %v168 = vrot.slane %v151, %v167
    %v169 = vlaneseq
    %v170 = vshrl.u32 %v169, 7
    %v171 = vsub.s32 4, %v170
    %v172 = vrot.slane %v151, %v171
    %v173 = vlaneseq
    %v174 = vshrl.u32 %v173, 7
    %v175 = vsub.s32 5, %v174
    %v176 = vrot.slane %v151, %v175
    %v177 = vlaneseq
    %v178 = vshrl.u32 %v177, 7
    %v179 = vsub.s32 6, %v178
    %v180 = vrot.slane %v151, %v179
    %v181 = vlaneseq
    %v182 = vshrl.u32 %v181, 7
    %v183 = vsub.s32 7, %v182
    %v184 = vrot.slane %v151, %v183
    %v225 = vunpack.c.l.b16 %v55
    %v226 = vunpack.c.l.b16 %v56
    %v227 = vunpack.c.l.b16 %v57
    %v228 = vunpack.c.l.b16 %v58
    %v229 = vunpack.c.l.b16 %v59
    %v230 = vunpack.c.l.b16 %v60
    %v231 = vunpack.c.l.b16 %v61
    %v232 = vunpack.c.l.b16 %v62
    %v233 = vunpack.c.l.b16 %v63
    %v234 = vunpack.c.l.b16 %v64
    %v235 = vunpack.c.l.b16 %v65
    %v236 = vunpack.c.l.b16 %v66
    %v237 = vunpack.c.l.b16 %v67
    %v238 = vunpack.c.l.b16 %v68
    %v239 = vunpack.c.l.b16 %v69
    %v240 = vunpack.c.l.b16 %v70
    %v241 = vunpack.c.l.b16 %v71
    %v242 = vunpack.c.l.b16 %v72
    %v243 = vunpack.c.l.b16 %v73
    %v244 = vunpack.c.l.b16 %v74
    %v245 = vunpack.c.l.b16 %v75
    %v246 = vunpack.c.l.b16 %v76
    %v247 = vunpack.c.l.b16 %v77
    %v248 = vunpack.c.l.b16 %v78
    %v249 = vunpack.c.l.b16 %v79
    %v250 = vunpack.c.l.b16 %v80
    %v251 = vunpack.c.l.b16 %v81
    %v252 = vunpack.c.l.b16 %v82
    %v253 = vunpack.c.l.b16 %v83
    %v254 = vunpack.c.l.b16 %v84
    %v255 = vunpack.c.l.b16 %v85
    %v256 = vunpack.c.l.b16 %v86
    %v257 = vpack.c.b16 %v226, %v225
    %v258 = vpack.c.b16 %v228, %v227
    %v259 = vpack.c.b16 %v230, %v229
    %v260 = vpack.c.b16 %v232, %v231
    %v261 = vpack.c.b16 %v234, %v233
    %v262 = vpack.c.b16 %v236, %v235
    %v263 = vpack.c.b16 %v238, %v237
    %v264 = vpack.c.b16 %v240, %v239
    %v265 = vpack.c.b16 %v242, %v241
    %v266 = vpack.c.b16 %v244, %v243
    %v267 = vpack.c.b16 %v246, %v245
    %v268 = vpack.c.b16 %v248, %v247
    %v269 = vpack.c.b16 %v250, %v249
    %v270 = vpack.c.b16 %v252, %v251
    %v271 = vpack.c.b16 %v254, %v253
    %v272 = vpack.c.b16 %v256, %v255
    %v353 = vunpack.c.l.b16 %v87
    %v354 = vunpack.c.h.b16 %v87
    %v355 = vunpack.c.l.b16 %v88
    %v356 = vunpack.c.h.b16 %v88
    %v357 = vunpack.c.l.b16 %v89
    %v358 = vunpack.c.h.b16 %v89
    %v359 = vunpack.c.l.b16 %v90
    %v360 = vunpack.c.h.b16 %v90
    %v361 = vunpack.c.l.b16 %v91
    %v362 = vunpack.c.h.b16 %v91
    %v363 = vunpack.c.l.b16 %v92
    %v364 = vunpack.c.h.b16 %v92
    %v365 = vunpack.c.l.b16 %v93
    %v366 = vunpack.c.h.b16 %v93
    %v367 = vunpack.c.l.b16 %v94
    %v368 = vunpack.c.h.b16 %v94
    %v369 = vunpack.c.l.b16 %v95
    %v370 = vunpack.c.h.b16 %v95
    %v371 = vunpack.c.l.b16 %v96
    %v372 = vunpack.c.h.b16 %v96
    %v373 = vunpack.c.l.b16 %v97
    %v374 = vunpack.c.h.b16 %v97
    %v375 = vunpack.c.l.b16 %v98
    %v376 = vunpack.c.h.b16 %v98
    %v377 = vunpack.c.l.b16 %v99
    %v378 = vunpack.c.h.b16 %v99
    %v379 = vunpack.c.l.b16 %v100
    %v380 = vunpack.c.h.b16 %v100
    %v381 = vunpack.c.l.b16 %v101
    %v382 = vunpack.c.h.b16 %v101
    %v383 = vunpack.c.l.b16 %v102
    %v384 = vunpack.c.h.b16 %v102
    %v385 = vunpack.c.l.b16 %v103
    %v386 = vunpack.c.h.b16 %v103
    %v387 = vunpack.c.l.b16 %v104
    %v388 = vunpack.c.h.b16 %v104
    %v389 = vunpack.c.l.b16 %v105
    %v390 = vunpack.c.h.b16 %v105
    %v391 = vunpack.c.l.b16 %v106
    %v392 = vunpack.c.h.b16 %v106
    %v393 = vunpack.c.l.b16 %v107
    %v394 = vunpack.c.h.b16 %v107
    %v395 = vunpack.c.l.b16 %v108
    %v396 = vunpack.c.h.b16 %v108
    %v397 = vunpack.c.l.b16 %v109
    %v398 = vunpack.c.h.b16 %v109
    %v399 = vunpack.c.l.b16 %v110
    %v400 = vunpack.c.h.b16 %v110
    %v401 = vunpack.c.l.b16 %v111
    %v402 = vunpack.c.h.b16 %v111
    %v403 = vunpack.c.l.b16 %v112
    %v404 = vunpack.c.h.b16 %v112
    %v405 = vunpack.c.l.b16 %v113
    %v406 = vunpack.c.h.b16 %v113
    %v407 = vunpack.c.l.b16 %v114
    %v408 = vunpack.c.h.b16 %v114
    %v409 = vunpack.c.l.b16 %v115
    %v410 = vunpack.c.h.b16 %v115
    %v411 = vunpack.c.l.b16 %v116
    %v412 = vunpack.c.h.b16 %v116
    %v413 = vunpack.c.l.b16 %v117
    %v414 = vunpack.c.h.b16 %v117
    %v415 = vunpack.c.l.b16 %v118
    %v416 = vunpack.c.h.b16 %v118
    %v417 = vunpack.c.l.b16 %v119
    %v418 = vunpack.c.h.b16 %v119
    %v419 = vunpack.c.l.b16 %v120
    %v420 = vunpack.c.h.b16 %v120
    %v421 = vunpack.c.l.b16 %v121
    %v422 = vunpack.c.h.b16 %v121
    %v423 = vunpack.c.l.b16 %v122
    %v424 = vunpack.c.h.b16 %v122
    %v425 = vunpack.c.l.b16 %v123
    %v426 = vunpack.c.h.b16 %v123
    %v427 = vunpack.c.l.b16 %v124
    %v428 = vunpack.c.h.b16 %v124
    %v429 = vunpack.c.l.b16 %v125
    %v430 = vunpack.c.h.b16 %v125
    %v431 = vunpack.c.l.b16 %v126
    %v432 = vunpack.c.h.b16 %v126
    %v433 = vunpack.c.l.b16 %v127
    %v434 = vunpack.c.h.b16 %v127
    %v435 = vunpack.c.l.b16 %v128
    %v436 = vunpack.c.h.b16 %v128
    %v437 = vunpack.c.l.b16 %v129
    %v438 = vunpack.c.h.b16 %v129
    %v439 = vunpack.c.l.b16 %v130
    %v440 = vunpack.c.h.b16 %v130
    %v441 = vunpack.c.l.b16 %v131
    %v442 = vunpack.c.h.b16 %v131
    %v443 = vunpack.c.l.b16 %v132
    %v444 = vunpack.c.h.b16 %v132
    %v445 = vunpack.c.l.b16 %v133
    %v446 = vunpack.c.h.b16 %v133
    %v447 = vunpack.c.l.b16 %v134
    %v448 = vunpack.c.h.b16 %v134
    %v449 = vunpack.c.l.b16 %v135
    %v450 = vunpack.c.h.b16 %v135
    %v451 = vunpack.c.l.b16 %v136
    %v452 = vunpack.c.h.b16 %v136
    %v453 = vunpack.c.l.b16 %v137
    %v454 = vunpack.c.h.b16 %v137
    %v455 = vunpack.c.l.b16 %v138
    %v456 = vunpack.c.h.b16 %v138
    %v457 = vunpack.c.l.b16 %v139
    %v458 = vunpack.c.h.b16 %v139
    %v459 = vunpack.c.l.b16 %v140
    %v460 = vunpack.c.h.b16 %v140
    %v461 = vunpack.c.l.b16 %v141
    %v462 = vunpack.c.h.b16 %v141
    %v463 = vunpack.c.l.b16 %v142
    %v464 = vunpack.c.h.b16 %v142
    %v465 = vunpack.c.l.b16 %v143
    %v466 = vunpack.c.h.b16 %v143
    %v467 = vunpack.c.l.b16 %v144
    %v468 = vunpack.c.h.b16 %v144
    %v469 = vunpack.c.l.b16 %v145
    %v470 = vunpack.c.h.b16 %v145
    %v471 = vunpack.c.l.b16 %v146
    %v472 = vunpack.c.h.b16 %v146
    %v473 = vunpack.c.l.b16 %v147
    %v474 = vunpack.c.h.b16 %v147
    %v475 = vunpack.c.l.b16 %v148
    %v476 = vunpack.c.h.b16 %v148
    %v477 = vunpack.c.l.b16 %v149
    %v478 = vunpack.c.h.b16 %v149
    %v479 = vunpack.c.l.b16 %v150
    %v480 = vunpack.c.h.b16 %v150
    %v481 = vpack.c.b16 %v361, %v353
    %v482 = vpack.c.b16 %v362, %v354
    %v483 = vpack.c.b16 %v363, %v355
    %v484 = vpack.c.b16 %v364, %v356
    %v485 = vpack.c.b16 %v365, %v357
    %v486 = vpack.c.b16 %v366, %v358
    %v487 = vpack.c.b16 %v367, %v359
    %v488 = vpack.c.b16 %v368, %v360
    %v489 = vpack.c.b16 %v377, %v369
    %v490 = vpack.c.b16 %v378, %v370
    %v491 = vpack.c.b16 %v379, %v371
    %v492 = vpack.c.b16 %v380, %v372
    %v493 = vpack.c.b16 %v381, %v373
    %v494 = vpack.c.b16 %v382, %v374
    %v495 = vpack.c.b16 %v383, %v375
    %v496 = vpack.c.b16 %v384, %v376
    %v497 = vpack.c.b16 %v393, %v385
    %v498 = vpack.c.b16 %v394, %v386
    %v499 = vpack.c.b16 %v395, %v387
    %v500 = vpack.c.b16 %v396, %v388
    %v501 = vpack.c.b16 %v397, %v389
    %v502 = vpack.c.b16 %v398, %v390
    %v503 = vpack.c.b16 %v399, %v391
    %v504 = vpack.c.b16 %v400, %v392
    %v505 = vpack.c.b16 %v409, %v401
    %v506 = vpack.c.b16 %v410, %v402
    %v507 = vpack.c.b16 %v411, %v403
    %v508 = vpack.c.b16 %v412, %v404
    %v509 = vpack.c.b16 %v413, %v405
    %v510 = vpack.c.b16 %v414, %v406
    %v511 = vpack.c.b16 %v415, %v407
    %v512 = vpack.c.b16 %v416, %v408
    %v513 = vpack.c.b16 %v425, %v417
    %v514 = vpack.c.b16 %v426, %v418
    %v515 = vpack.c.b16 %v427, %v419
    %v516 = vpack.c.b16 %v428, %v420
    %v517 = vpack.c.b16 %v429, %v421
    %v518 = vpack.c.b16 %v430, %v422
    %v519 = vpack.c.b16 %v431, %v423
    %v520 = vpack.c.b16 %v432, %v424
    %v521 = vpack.c.b16 %v441, %v433
    %v522 = vpack.c.b16 %v442, %v434
    %v523 = vpack.c.b16 %v443, %v435
    %v524 = vpack.c.b16 %v444, %v436
    %v525 = vpack.c.b16 %v445, %v437
    %v526 = vpack.c.b16 %v446, %v438
    %v527 = vpack.c.b16 %v447, %v439
    %v528 = vpack.c.b16 %v448, %v440
    %v529 = vpack.c.b16 %v457, %v449
    %v530 = vpack.c.b16 %v458, %v450
    %v531 = vpack.c.b16 %v459, %v451
    %v532 = vpack.c.b16 %v460, %v452
    %v533 = vpack.c.b16 %v461, %v453
    %v534 = vpack.c.b16 %v462, %v454
    %v535 = vpack.c.b16 %v463, %v455
    %v536 = vpack.c.b16 %v464, %v456
    %v537 = vpack.c.b16 %v473, %v465
    %v538 = vpack.c.b16 %v474, %v466
    %v539 = vpack.c.b16 %v475, %v467
    %v540 = vpack.c.b16 %v476, %v468
    %v541 = vpack.c.b16 %v477, %v469
    %v542 = vpack.c.b16 %v478, %v470
    %v543 = vpack.c.b16 %v479, %v471
    %v544 = vpack.c.b16 %v480, %v472
    %609 = vmatprep.subr.bf16.mxu0 %v482
    %610 = vmatpush1.bf16.msra.mxu0 %v481
    %611 = vmatprep.subr.bf16.mxu0 %v490
    %612 = vmatpush1.bf16.msra.mxu0 %v489
    %613 = vmatprep.subr.bf16.mxu0 %v498
    %614 = vmatpush1.bf16.msra.mxu0 %v497
    %615 = vmatprep.subr.bf16.mxu0 %v506
    %616 = vmatpush1.bf16.msra.mxu0 %v505
    %617 = vmatprep.subr.bf16.mxu0 %v514
    %618 = vmatpush1.bf16.msra.mxu0 %v513
    %619 = vmatprep.subr.bf16.mxu0 %v522
    %620 = vmatpush1.bf16.msra.mxu0 %v521
    %621 = vmatprep.subr.bf16.mxu0 %v530
    %622 = vmatpush1.bf16.msra.mxu0 %v529
    %623 = vmatprep.subr.bf16.mxu0 %v538
    %624 = vmatpush1.bf16.msra.mxu0 %v537
    %625 = vmatprep.subr.bf16.mxu0 0
    %626 = vmatpush1.bf16.msra.mxu0 0
    %627 = vmatprep.subr.bf16.mxu0 0
    %628 = vmatpush1.bf16.msra.mxu0 0
    %629 = vmatprep.subr.bf16.mxu0 0
    %630 = vmatpush1.bf16.msra.mxu0 0
    %631 = vmatprep.subr.bf16.mxu0 0
    %632 = vmatpush1.bf16.msra.mxu0 0
    %633 = vmatprep.subr.bf16.mxu0 0
    %634 = vmatpush1.bf16.msra.mxu0 0
    %635 = vmatprep.subr.bf16.mxu0 0
    %636 = vmatpush1.bf16.msra.mxu0 0
    %637 = vmatprep.subr.bf16.mxu0 0
    %638 = vmatpush1.bf16.msra.mxu0 0
    %639 = vmatprep.subr.bf16.mxu0 0
    %640 = vmatpush1.bf16.msra.mxu0 0
    %641 = vmatprep.mubr.bf16.mxu0 0
    %642 = vmatmul.mubr.bf16.gmra.mrb[0].mxu0 %v257
    %v643 = vpop.f32.mrb[0].mxu0
    %v644 = vadd.f32 %v156, %v643
    %v645 = vpop.f32.mrb[0].mxu0
    %v646 = vadd.f32 %v160, %v645
    %v647 = vpop.f32.mrb[0].mxu0
    %v648 = vadd.f32 %v156, %v647
    %v649 = vpop.f32.mrb[0].mxu0
    %v650 = vadd.f32 %v160, %v649
    %651 = vmatprep.mubr.bf16.mxu0 0
    %652 = vmatmul.mubr.bf16.gmra.mrb[0].mxu0 %v258
    %v653 = vpop.f32.mrb[0].mxu0
    %v654 = vadd.f32 %v156, %v653
    %v655 = vpop.f32.mrb[0].mxu0
    %v656 = vadd.f32 %v160, %v655
    %v657 = vpop.f32.mrb[0].mxu0
    %v658 = vadd.f32 %v156, %v657
    %v659 = vpop.f32.mrb[0].mxu0
    %v660 = vadd.f32 %v160, %v659
    %661 = vmatprep.mubr.bf16.mxu0 0
    %662 = vmatmul.mubr.bf16.gmra.mrb[0].mxu0 %v259
    %v663 = vpop.f32.mrb[0].mxu0
    %v664 = vadd.f32 %v156, %v663
    %v665 = vpop.f32.mrb[0].mxu0
    %v666 = vadd.f32 %v160, %v665
    %v667 = vpop.f32.mrb[0].mxu0
    %v668 = vadd.f32 %v156, %v667
    %v669 = vpop.f32.mrb[0].mxu0
    %v670 = vadd.f32 %v160, %v669
    %671 = vmatprep.mubr.bf16.mxu0 0
    %672 = vmatmul.mubr.bf16.gmra.mrb[0].mxu0 %v260
    %v673 = vpop.f32.mrb[0].mxu0
    %v674 = vadd.f32 %v156, %v673
    %v675 = vpop.f32.mrb[0].mxu0
    %v676 = vadd.f32 %v160, %v675
    %v677 = vpop.f32.mrb[0].mxu0
    %v678 = vadd.f32 %v156, %v677
    %v679 = vpop.f32.mrb[0].mxu0
    %v680 = vadd.f32 %v160, %v679
    %681 = vmatprep.mubr.bf16.mxu0 0
    %682 = vmatmul.mubr.bf16.gmra.mrb[0].mxu0 %v261
    %v683 = vpop.f32.mrb[0].mxu0
    %v684 = vadd.f32 %v156, %v683
    %v685 = vpop.f32.mrb[0].mxu0
    %v686 = vadd.f32 %v160, %v685
    %v687 = vpop.f32.mrb[0].mxu0
    %v688 = vadd.f32 %v156, %v687
    %v689 = vpop.f32.mrb[0].mxu0
    %v690 = vadd.f32 %v160, %v689
    %691 = vmatprep.mubr.bf16.mxu0 0
    %692 = vmatmul.mubr.bf16.gmra.mrb[0].mxu0 %v262
    %v693 = vpop.f32.mrb[0].mxu0
    %v694 = vadd.f32 %v156, %v693
    %v695 = vpop.f32.mrb[0].mxu0
    %v696 = vadd.f32 %v160, %v695
    %v697 = vpop.f32.mrb[0].mxu0
    %v698 = vadd.f32 %v156, %v697
    %v699 = vpop.f32.mrb[0].mxu0
    %v700 = vadd.f32 %v160, %v699
    %701 = vmatprep.mubr.bf16.mxu0 0
    %702 = vmatmul.mubr.bf16.gmra.mrb[0].mxu0 %v263
    %v703 = vpop.f32.mrb[0].mxu0
    %v704 = vadd.f32 %v156, %v703
    %v705 = vpop.f32.mrb[0].mxu0
    %v706 = vadd.f32 %v160, %v705
    %v707 = vpop.f32.mrb[0].mxu0
    %v708 = vadd.f32 %v156, %v707
    %v709 = vpop.f32.mrb[0].mxu0
    %v710 = vadd.f32 %v160, %v709
    %711 = vmatprep.mubr.bf16.mxu0 0
    %712 = vmatmul.mubr.bf16.gmra.mrb[0].mxu0 %v264
    %v713 = vpop.f32.mrb[0].mxu0
    %v714 = vadd.f32 %v156, %v713
    %v715 = vpop.f32.mrb[0].mxu0
    %v716 = vadd.f32 %v160, %v715
    %v717 = vpop.f32.mrb[0].mxu0
    %v718 = vadd.f32 %v156, %v717
    %v719 = vpop.f32.mrb[0].mxu0
    %v720 = vadd.f32 %v160, %v719
    %721 = vmatprep.mubr.bf16.mxu0 0
    %722 = vmatmul.mubr.bf16.gmra.mrb[0].mxu0 %v265
    %v723 = vpop.f32.mrb[0].mxu0
    %v724 = vadd.f32 %v156, %v723
    %v725 = vpop.f32.mrb[0].mxu0
    %v726 = vadd.f32 %v160, %v725
    %v727 = vpop.f32.mrb[0].mxu0
    %v728 = vadd.f32 %v156, %v727
    %v729 = vpop.f32.mrb[0].mxu0
    %v730 = vadd.f32 %v160, %v729
    %731 = vmatprep.mubr.bf16.mxu0 0
    %732 = vmatmul.mubr.bf16.gmra.mrb[0].mxu0 %v266
    %v733 = vpop.f32.mrb[0].mxu0
    %v734 = vadd.f32 %v156, %v733
    %v735 = vpop.f32.mrb[0].mxu0
    %v736 = vadd.f32 %v160, %v735
    %v737 = vpop.f32.mrb[0].mxu0
    %v738 = vadd.f32 %v156, %v737
    %v739 = vpop.f32.mrb[0].mxu0
    %v740 = vadd.f32 %v160, %v739
    %741 = vmatprep.mubr.bf16.mxu0 0
    %742 = vmatmul.mubr.bf16.gmra.mrb[0].mxu0 %v267
    %v743 = vpop.f32.mrb[0].mxu0
    %v744 = vadd.f32 %v156, %v743
    %v745 = vpop.f32.mrb[0].mxu0
    %v746 = vadd.f32 %v160, %v745
    %v747 = vpop.f32.mrb[0].mxu0
    %v748 = vadd.f32 %v156, %v747
    %v749 = vpop.f32.mrb[0].mxu0
    %v750 = vadd.f32 %v160, %v749
    %751 = vmatprep.mubr.bf16.mxu0 0
    %752 = vmatmul.mubr.bf16.gmra.mrb[0].mxu0 %v268
    %v753 = vpop.f32.mrb[0].mxu0
    %v754 = vadd.f32 %v156, %v753
    %v755 = vpop.f32.mrb[0].mxu0
    %v756 = vadd.f32 %v160, %v755
    %v757 = vpop.f32.mrb[0].mxu0
    %v758 = vadd.f32 %v156, %v757
    %v759 = vpop.f32.mrb[0].mxu0
    %v760 = vadd.f32 %v160, %v759
    %761 = vmatprep.mubr.bf16.mxu0 0
    %762 = vmatmul.mubr.bf16.gmra.mrb[0].mxu0 %v269
    %v763 = vpop.f32.mrb[0].mxu0
    %v764 = vadd.f32 %v156, %v763
    %v765 = vpop.f32.mrb[0].mxu0
    %v766 = vadd.f32 %v160, %v765
    %v767 = vpop.f32.mrb[0].mxu0
    %v768 = vadd.f32 %v156, %v767
    %v769 = vpop.f32.mrb[0].mxu0
    %v770 = vadd.f32 %v160, %v769
    %771 = vmatprep.mubr.bf16.mxu0 0
    %772 = vmatmul.mubr.bf16.gmra.mrb[0].mxu0 %v270
    %v773 = vpop.f32.mrb[0].mxu0
    %v774 = vadd.f32 %v156, %v773
    %v775 = vpop.f32.mrb[0].mxu0
    %v776 = vadd.f32 %v160, %v775
    %v777 = vpop.f32.mrb[0].mxu0
    %v778 = vadd.f32 %v156, %v777
    %v779 = vpop.f32.mrb[0].mxu0
    %v780 = vadd.f32 %v160, %v779
    %781 = vmatprep.mubr.bf16.mxu0 0
    %782 = vmatmul.mubr.bf16.gmra.mrb[0].mxu0 %v271
    %v783 = vpop.f32.mrb[0].mxu0
    %v784 = vadd.f32 %v156, %v783
    %v785 = vpop.f32.mrb[0].mxu0
    %v786 = vadd.f32 %v160, %v785
    %v787 = vpop.f32.mrb[0].mxu0
    %v788 = vadd.f32 %v156, %v787
    %v789 = vpop.f32.mrb[0].mxu0
    %v790 = vadd.f32 %v160, %v789
    %791 = vmatprep.mubr.bf16.mxu0 0
    %792 = vmatmul.mubr.bf16.gmra.mrb[0].mxu0 %v272
    %v793 = vpop.f32.mrb[0].mxu0
    %v794 = vadd.f32 %v156, %v793
    %v795 = vpop.f32.mrb[0].mxu0
    %v796 = vadd.f32 %v160, %v795
    %v797 = vpop.f32.mrb[0].mxu0
    %v798 = vadd.f32 %v156, %v797
    %v799 = vpop.f32.mrb[0].mxu0
    %v800 = vadd.f32 %v160, %v799
    %801 = vdwg.mxu0
    %802 = vmatprep.subr.bf16.mxu0 %v484
    %803 = vmatpush1.bf16.msra.mxu0 %v483
    %804 = vmatprep.subr.bf16.mxu0 %v492
    %805 = vmatpush1.bf16.msra.mxu0 %v491
    %806 = vmatprep.subr.bf16.mxu0 %v500
    %807 = vmatpush1.bf16.msra.mxu0 %v499
    %808 = vmatprep.subr.bf16.mxu0 %v508
    %809 = vmatpush1.bf16.msra.mxu0 %v507
    %810 = vmatprep.subr.bf16.mxu0 %v516
    %811 = vmatpush1.bf16.msra.mxu0 %v515
    %812 = vmatprep.subr.bf16.mxu0 %v524
    %813 = vmatpush1.bf16.msra.mxu0 %v523
    %814 = vmatprep.subr.bf16.mxu0 %v532
    %815 = vmatpush1.bf16.msra.mxu0 %v531
    %816 = vmatprep.subr.bf16.mxu0 %v540
    %817 = vmatpush1.bf16.msra.mxu0 %v539
    %818 = vmatprep.subr.bf16.mxu0 0
    %819 = vmatpush1.bf16.msra.mxu0 0
    %820 = vmatprep.subr.bf16.mxu0 0
    %821 = vmatpush1.bf16.msra.mxu0 0
    %822 = vmatprep.subr.bf16.mxu0 0
    %823 = vmatpush1.bf16.msra.mxu0 0
    %824 = vmatprep.subr.bf16.mxu0 0
    %825 = vmatpush1.bf16.msra.mxu0 0
    %826 = vmatprep.subr.bf16.mxu0 0
    %827 = vmatpush1.bf16.msra.mxu0 0
    %828 = vmatprep.subr.bf16.mxu0 0
    %829 = vmatpush1.bf16.msra.mxu0 0
    %830 = vmatprep.subr.bf16.mxu0 0
    %831 = vmatpush1.bf16.msra.mxu0 0
    %832 = vmatprep.subr.bf16.mxu0 0
    %833 = vmatpush1.bf16.msra.mxu0 0
    %834 = vmatprep.mubr.bf16.mxu0 0
    %835 = vmatmul.mubr.bf16.gmra.mrb[0].mxu0 %v257
    %v836 = vpop.f32.mrb[0].mxu0
    %v837 = vadd.f32 %v164, %v836
    %v838 = vpop.f32.mrb[0].mxu0
    %v839 = vadd.f32 %v168, %v838
    %v840 = vpop.f32.mrb[0].mxu0
    %v841 = vadd.f32 %v164, %v840
    %v842 = vpop.f32.mrb[0].mxu0
    %v843 = vadd.f32 %v168, %v842
    %844 = vmatprep.mubr.bf16.mxu0 0
    %845 = vmatmul.mubr.bf16.gmra.mrb[0].mxu0 %v258
    %v846 = vpop.f32.mrb[0].mxu0
    %v847 = vadd.f32 %v164, %v846
    %v848 = vpop.f32.mrb[0].mxu0
    %v849 = vadd.f32 %v168, %v848
    %v850 = vpop.f32.mrb[0].mxu0
    %v851 = vadd.f32 %v164, %v850
    %v852 = vpop.f32.mrb[0].mxu0
    %v853 = vadd.f32 %v168, %v852
    %854 = vmatprep.mubr.bf16.mxu0 0
    %855 = vmatmul.mubr.bf16.gmra.mrb[0].mxu0 %v259
    %v856 = vpop.f32.mrb[0].mxu0
    %v857 = vadd.f32 %v164, %v856
    %v858 = vpop.f32.mrb[0].mxu0
    %v859 = vadd.f32 %v168, %v858
    %v860 = vpop.f32.mrb[0].mxu0
    %v861 = vadd.f32 %v164, %v860
    %v862 = vpop.f32.mrb[0].mxu0
    %v863 = vadd.f32 %v168, %v862
    %864 = vmatprep.mubr.bf16.mxu0 0
    %865 = vmatmul.mubr.bf16.gmra.mrb[0].mxu0 %v260
    %v866 = vpop.f32.mrb[0].mxu0
    %v867 = vadd.f32 %v164, %v866
    %v868 = vpop.f32.mrb[0].mxu0
    %v869 = vadd.f32 %v168, %v868
    %v870 = vpop.f32.mrb[0].mxu0
    %v871 = vadd.f32 %v164, %v870
    %v872 = vpop.f32.mrb[0].mxu0
    %v873 = vadd.f32 %v168, %v872
    %874 = vmatprep.mubr.bf16.mxu0 0
    %875 = vmatmul.mubr.bf16.gmra.mrb[0].mxu0 %v261
    %v876 = vpop.f32.mrb[0].mxu0
    %v877 = vadd.f32 %v164, %v876
    %v878 = vpop.f32.mrb[0].mxu0
    %v879 = vadd.f32 %v168, %v878
    %v880 = vpop.f32.mrb[0].mxu0
    %v881 = vadd.f32 %v164, %v880
    %v882 = vpop.f32.mrb[0].mxu0
    %v883 = vadd.f32 %v168, %v882
    %884 = vmatprep.mubr.bf16.mxu0 0
    %885 = vmatmul.mubr.bf16.gmra.mrb[0].mxu0 %v262
    %v886 = vpop.f32.mrb[0].mxu0
    %v887 = vadd.f32 %v164, %v886
    %v888 = vpop.f32.mrb[0].mxu0
    %v889 = vadd.f32 %v168, %v888
    %v890 = vpop.f32.mrb[0].mxu0
    %v891 = vadd.f32 %v164, %v890
    %v892 = vpop.f32.mrb[0].mxu0
    %v893 = vadd.f32 %v168, %v892
    %894 = vmatprep.mubr.bf16.mxu0 0
    %895 = vmatmul.mubr.bf16.gmra.mrb[0].mxu0 %v263
    %v896 = vpop.f32.mrb[0].mxu0
    %v897 = vadd.f32 %v164, %v896
    %v898 = vpop.f32.mrb[0].mxu0
    %v899 = vadd.f32 %v168, %v898
    %v900 = vpop.f32.mrb[0].mxu0
    %v901 = vadd.f32 %v164, %v900
    %v902 = vpop.f32.mrb[0].mxu0
    %v903 = vadd.f32 %v168, %v902
    %904 = vmatprep.mubr.bf16.mxu0 0
    %905 = vmatmul.mubr.bf16.gmra.mrb[0].mxu0 %v264
    %v906 = vpop.f32.mrb[0].mxu0
    %v907 = vadd.f32 %v164, %v906
    %v908 = vpop.f32.mrb[0].mxu0
    %v909 = vadd.f32 %v168, %v908
    %v910 = vpop.f32.mrb[0].mxu0
    %v911 = vadd.f32 %v164, %v910
    %v912 = vpop.f32.mrb[0].mxu0
    %v913 = vadd.f32 %v168, %v912
    %914 = vmatprep.mubr.bf16.mxu0 0
    %915 = vmatmul.mubr.bf16.gmra.mrb[0].mxu0 %v265
    %v916 = vpop.f32.mrb[0].mxu0
    %v917 = vadd.f32 %v164, %v916
    %v918 = vpop.f32.mrb[0].mxu0
    %v919 = vadd.f32 %v168, %v918
    %v920 = vpop.f32.mrb[0].mxu0
    %v921 = vadd.f32 %v164, %v920
    %v922 = vpop.f32.mrb[0].mxu0
    %v923 = vadd.f32 %v168, %v922
    %924 = vmatprep.mubr.bf16.mxu0 0
    %925 = vmatmul.mubr.bf16.gmra.mrb[0].mxu0 %v266
    %v926 = vpop.f32.mrb[0].mxu0
    %v927 = vadd.f32 %v164, %v926
    %v928 = vpop.f32.mrb[0].mxu0
    %v929 = vadd.f32 %v168, %v928
    %v930 = vpop.f32.mrb[0].mxu0
    %v931 = vadd.f32 %v164, %v930
    %v932 = vpop.f32.mrb[0].mxu0
    %v933 = vadd.f32 %v168, %v932
    %934 = vmatprep.mubr.bf16.mxu0 0
    %935 = vmatmul.mubr.bf16.gmra.mrb[0].mxu0 %v267
    %v936 = vpop.f32.mrb[0].mxu0
    %v937 = vadd.f32 %v164, %v936
    %v938 = vpop.f32.mrb[0].mxu0
    %v939 = vadd.f32 %v168, %v938
    %v940 = vpop.f32.mrb[0].mxu0
    %v941 = vadd.f32 %v164, %v940
    %v942 = vpop.f32.mrb[0].mxu0
    %v943 = vadd.f32 %v168, %v942
    %944 = vmatprep.mubr.bf16.mxu0 0
    %945 = vmatmul.mubr.bf16.gmra.mrb[0].mxu0 %v268
    %v946 = vpop.f32.mrb[0].mxu0
    %v947 = vadd.f32 %v164, %v946
    %v948 = vpop.f32.mrb[0].mxu0
    %v949 = vadd.f32 %v168, %v948
    %v950 = vpop.f32.mrb[0].mxu0
    %v951 = vadd.f32 %v164, %v950
    %v952 = vpop.f32.mrb[0].mxu0
    %v953 = vadd.f32 %v168, %v952
    %954 = vmatprep.mubr.bf16.mxu0 0
    %955 = vmatmul.mubr.bf16.gmra.mrb[0].mxu0 %v269
    %v956 = vpop.f32.mrb[0].mxu0
    %v957 = vadd.f32 %v164, %v956
    %v958 = vpop.f32.mrb[0].mxu0
    %v959 = vadd.f32 %v168, %v958
    %v960 = vpop.f32.mrb[0].mxu0
    %v961 = vadd.f32 %v164, %v960
    %v962 = vpop.f32.mrb[0].mxu0
    %v963 = vadd.f32 %v168, %v962
    %964 = vmatprep.mubr.bf16.mxu0 0
    %965 = vmatmul.mubr.bf16.gmra.mrb[0].mxu0 %v270
    %v966 = vpop.f32.mrb[0].mxu0
    %v967 = vadd.f32 %v164, %v966
    %v968 = vpop.f32.mrb[0].mxu0
    %v969 = vadd.f32 %v168, %v968
    %v970 = vpop.f32.mrb[0].mxu0
    %v971 = vadd.f32 %v164, %v970
    %v972 = vpop.f32.mrb[0].mxu0
    %v973 = vadd.f32 %v168, %v972
    %974 = vmatprep.mubr.bf16.mxu0 0
    %975 = vmatmul.mubr.bf16.gmra.mrb[0].mxu0 %v271
    %v976 = vpop.f32.mrb[0].mxu0
    %v977 = vadd.f32 %v164, %v976
    %v978 = vpop.f32.mrb[0].mxu0
    %v979 = vadd.f32 %v168, %v978
    %v980 = vpop.f32.mrb[0].mxu0
    %v981 = vadd.f32 %v164, %v980
    %v982 = vpop.f32.mrb[0].mxu0
    %v983 = vadd.f32 %v168, %v982
    %984 = vmatprep.mubr.bf16.mxu0 0
    %985 = vmatmul.mubr.bf16.gmra.mrb[0].mxu0 %v272
    %v986 = vpop.f32.mrb[0].mxu0
    %v987 = vadd.f32 %v164, %v986
    %v988 = vpop.f32.mrb[0].mxu0
    %v989 = vadd.f32 %v168, %v988
    %v990 = vpop.f32.mrb[0].mxu0
    %v991 = vadd.f32 %v164, %v990
    %v992 = vpop.f32.mrb[0].mxu0
    %v993 = vadd.f32 %v168, %v992
    %994 = vdwg.mxu0
    %995 = vmatprep.subr.bf16.mxu0 %v486
    %996 = vmatpush1.bf16.msra.mxu0 %v485
    %997 = vmatprep.subr.bf16.mxu0 %v494
    %998 = vmatpush1.bf16.msra.mxu0 %v493
    %999 = vmatprep.subr.bf16.mxu0 %v502
    %1000 = vmatpush1.bf16.msra.mxu0 %v501
    %1001 = vmatprep.subr.bf16.mxu0 %v510
    %1002 = vmatpush1.bf16.msra.mxu0 %v509
    %1003 = vmatprep.subr.bf16.mxu0 %v518
    %1004 = vmatpush1.bf16.msra.mxu0 %v517
    %1005 = vmatprep.subr.bf16.mxu0 %v526
    %1006 = vmatpush1.bf16.msra.mxu0 %v525
    %1007 = vmatprep.subr.bf16.mxu0 %v534
    %1008 = vmatpush1.bf16.msra.mxu0 %v533
    %1009 = vmatprep.subr.bf16.mxu0 %v542
    %1010 = vmatpush1.bf16.msra.mxu0 %v541
    %1011 = vmatprep.subr.bf16.mxu0 0
    %1012 = vmatpush1.bf16.msra.mxu0 0
    %1013 = vmatprep.subr.bf16.mxu0 0
    %1014 = vmatpush1.bf16.msra.mxu0 0
    %1015 = vmatprep.subr.bf16.mxu0 0
    %1016 = vmatpush1.bf16.msra.mxu0 0
    %1017 = vmatprep.subr.bf16.mxu0 0
    %1018 = vmatpush1.bf16.msra.mxu0 0
    %1019 = vmatprep.subr.bf16.mxu0 0
    %1020 = vmatpush1.bf16.msra.mxu0 0
    %1021 = vmatprep.subr.bf16.mxu0 0
    %1022 = vmatpush1.bf16.msra.mxu0 0
    %1023 = vmatprep.subr.bf16.mxu0 0
    %1024 = vmatpush1.bf16.msra.mxu0 0
    %1025 = vmatprep.subr.bf16.mxu0 0
    %1026 = vmatpush1.bf16.msra.mxu0 0
    %1027 = vmatprep.mubr.bf16.mxu0 0
    %1028 = vmatmul.mubr.bf16.gmra.mrb[0].mxu0 %v257
    %v1029 = vpop.f32.mrb[0].mxu0
    %v1030 = vadd.f32 %v172, %v1029
    %v1031 = vpop.f32.mrb[0].mxu0
    %v1032 = vadd.f32 %v176, %v1031
    %v1033 = vpop.f32.mrb[0].mxu0
    %v1034 = vadd.f32 %v172, %v1033
    %v1035 = vpop.f32.mrb[0].mxu0
    %v1036 = vadd.f32 %v176, %v1035
    %1037 = vmatprep.mubr.bf16.mxu0 0
    %1038 = vmatmul.mubr.bf16.gmra.mrb[0].mxu0 %v258
    %v1039 = vpop.f32.mrb[0].mxu0
    %v1040 = vadd.f32 %v172, %v1039
    %v1041 = vpop.f32.mrb[0].mxu0
    %v1042 = vadd.f32 %v176, %v1041
    %v1043 = vpop.f32.mrb[0].mxu0
    %v1044 = vadd.f32 %v172, %v1043
    %v1045 = vpop.f32.mrb[0].mxu0
    %v1046 = vadd.f32 %v176, %v1045
    %1047 = vmatprep.mubr.bf16.mxu0 0
    %1048 = vmatmul.mubr.bf16.gmra.mrb[0].mxu0 %v259
    %v1049 = vpop.f32.mrb[0].mxu0
    %v1050 = vadd.f32 %v172, %v1049
    %v1051 = vpop.f32.mrb[0].mxu0
    %v1052 = vadd.f32 %v176, %v1051
    %v1053 = vpop.f32.mrb[0].mxu0
    %v1054 = vadd.f32 %v172, %v1053
    %v1055 = vpop.f32.mrb[0].mxu0
    %v1056 = vadd.f32 %v176, %v1055
    %1057 = vmatprep.mubr.bf16.mxu0 0
    %1058 = vmatmul.mubr.bf16.gmra.mrb[0].mxu0 %v260
    %v1059 = vpop.f32.mrb[0].mxu0
    %v1060 = vadd.f32 %v172, %v1059
    %v1061 = vpop.f32.mrb[0].mxu0
    %v1062 = vadd.f32 %v176, %v1061
    %v1063 = vpop.f32.mrb[0].mxu0
    %v1064 = vadd.f32 %v172, %v1063
    %v1065 = vpop.f32.mrb[0].mxu0
    %v1066 = vadd.f32 %v176, %v1065
    %1067 = vmatprep.mubr.bf16.mxu0 0
    %1068 = vmatmul.mubr.bf16.gmra.mrb[0].mxu0 %v261
    %v1069 = vpop.f32.mrb[0].mxu0
    %v1070 = vadd.f32 %v172, %v1069
    %v1071 = vpop.f32.mrb[0].mxu0
    %v1072 = vadd.f32 %v176, %v1071
    %v1073 = vpop.f32.mrb[0].mxu0
    %v1074 = vadd.f32 %v172, %v1073
    %v1075 = vpop.f32.mrb[0].mxu0
    %v1076 = vadd.f32 %v176, %v1075
    %1077 = vmatprep.mubr.bf16.mxu0 0
    %1078 = vmatmul.mubr.bf16.gmra.mrb[0].mxu0 %v262
    %v1079 = vpop.f32.mrb[0].mxu0
    %v1080 = vadd.f32 %v172, %v1079
    %v1081 = vpop.f32.mrb[0].mxu0
    %v1082 = vadd.f32 %v176, %v1081
    %v1083 = vpop.f32.mrb[0].mxu0
    %v1084 = vadd.f32 %v172, %v1083
    %v1085 = vpop.f32.mrb[0].mxu0
    %v1086 = vadd.f32 %v176, %v1085
    %1087 = vmatprep.mubr.bf16.mxu0 0
    %1088 = vmatmul.mubr.bf16.gmra.mrb[0].mxu0 %v263
    %v1089 = vpop.f32.mrb[0].mxu0
    %v1090 = vadd.f32 %v172, %v1089
    %v1091 = vpop.f32.mrb[0].mxu0
    %v1092 = vadd.f32 %v176, %v1091
    %v1093 = vpop.f32.mrb[0].mxu0
    %v1094 = vadd.f32 %v172, %v1093
    %v1095 = vpop.f32.mrb[0].mxu0
    %v1096 = vadd.f32 %v176, %v1095
    %1097 = vmatprep.mubr.bf16.mxu0 0
    %1098 = vmatmul.mubr.bf16.gmra.mrb[0].mxu0 %v264
    %v1099 = vpop.f32.mrb[0].mxu0
    %v1100 = vadd.f32 %v172, %v1099
    %v1101 = vpop.f32.mrb[0].mxu0
    %v1102 = vadd.f32 %v176, %v1101
    %v1103 = vpop.f32.mrb[0].mxu0
    %v1104 = vadd.f32 %v172, %v1103
    %v1105 = vpop.f32.mrb[0].mxu0
    %v1106 = vadd.f32 %v176, %v1105
    %1107 = vmatprep.mubr.bf16.mxu0 0
    %1108 = vmatmul.mubr.bf16.gmra.mrb[0].mxu0 %v265
    %v1109 = vpop.f32.mrb[0].mxu0
    %v1110 = vadd.f32 %v172, %v1109
    %v1111 = vpop.f32.mrb[0].mxu0
    %v1112 = vadd.f32 %v176, %v1111
    %v1113 = vpop.f32.mrb[0].mxu0
    %v1114 = vadd.f32 %v172, %v1113
    %v1115 = vpop.f32.mrb[0].mxu0
    %v1116 = vadd.f32 %v176, %v1115
    %1117 = vmatprep.mubr.bf16.mxu0 0
    %1118 = vmatmul.mubr.bf16.gmra.mrb[0].mxu0 %v266
    %v1119 = vpop.f32.mrb[0].mxu0
    %v1120 = vadd.f32 %v172, %v1119
    %v1121 = vpop.f32.mrb[0].mxu0
    %v1122 = vadd.f32 %v176, %v1121
    %v1123 = vpop.f32.mrb[0].mxu0
    %v1124 = vadd.f32 %v172, %v1123
    %v1125 = vpop.f32.mrb[0].mxu0
    %v1126 = vadd.f32 %v176, %v1125
    %1127 = vmatprep.mubr.bf16.mxu0 0
    %1128 = vmatmul.mubr.bf16.gmra.mrb[0].mxu0 %v267
    %v1129 = vpop.f32.mrb[0].mxu0
    %v1130 = vadd.f32 %v172, %v1129
    %v1131 = vpop.f32.mrb[0].mxu0
    %v1132 = vadd.f32 %v176, %v1131
    %v1133 = vpop.f32.mrb[0].mxu0
    %v1134 = vadd.f32 %v172, %v1133
    %v1135 = vpop.f32.mrb[0].mxu0
    %v1136 = vadd.f32 %v176, %v1135
    %1137 = vmatprep.mubr.bf16.mxu0 0
    %1138 = vmatmul.mubr.bf16.gmra.mrb[0].mxu0 %v268
    %v1139 = vpop.f32.mrb[0].mxu0
    %v1140 = vadd.f32 %v172, %v1139
    %v1141 = vpop.f32.mrb[0].mxu0
    %v1142 = vadd.f32 %v176, %v1141
    %v1143 = vpop.f32.mrb[0].mxu0
    %v1144 = vadd.f32 %v172, %v1143
    %v1145 = vpop.f32.mrb[0].mxu0
    %v1146 = vadd.f32 %v176, %v1145
    %1147 = vmatprep.mubr.bf16.mxu0 0
    %1148 = vmatmul.mubr.bf16.gmra.mrb[0].mxu0 %v269
    %v1149 = vpop.f32.mrb[0].mxu0
    %v1150 = vadd.f32 %v172, %v1149
    %v1151 = vpop.f32.mrb[0].mxu0
    %v1152 = vadd.f32 %v176, %v1151
    %v1153 = vpop.f32.mrb[0].mxu0
    %v1154 = vadd.f32 %v172, %v1153
    %v1155 = vpop.f32.mrb[0].mxu0
    %v1156 = vadd.f32 %v176, %v1155
    %1157 = vmatprep.mubr.bf16.mxu0 0
    %1158 = vmatmul.mubr.bf16.gmra.mrb[0].mxu0 %v270
    %v1159 = vpop.f32.mrb[0].mxu0
    %v1160 = vadd.f32 %v172, %v1159
    %v1161 = vpop.f32.mrb[0].mxu0
    %v1162 = vadd.f32 %v176, %v1161
    %v1163 = vpop.f32.mrb[0].mxu0
    %v1164 = vadd.f32 %v172, %v1163
    %v1165 = vpop.f32.mrb[0].mxu0
    %v1166 = vadd.f32 %v176, %v1165
    %1167 = vmatprep.mubr.bf16.mxu0 0
    %1168 = vmatmul.mubr.bf16.gmra.mrb[0].mxu0 %v271
    %v1169 = vpop.f32.mrb[0].mxu0
    %v1170 = vadd.f32 %v172, %v1169
    %v1171 = vpop.f32.mrb[0].mxu0
    %v1172 = vadd.f32 %v176, %v1171
    %v1173 = vpop.f32.mrb[0].mxu0
    %v1174 = vadd.f32 %v172, %v1173
    %v1175 = vpop.f32.mrb[0].mxu0
    %v1176 = vadd.f32 %v176, %v1175
    %1177 = vmatprep.mubr.bf16.mxu0 0
    %1178 = vmatmul.mubr.bf16.gmra.mrb[0].mxu0 %v272
    %v1179 = vpop.f32.mrb[0].mxu0
    %v1180 = vadd.f32 %v172, %v1179
    %v1181 = vpop.f32.mrb[0].mxu0
    %v1182 = vadd.f32 %v176, %v1181
    %v1183 = vpop.f32.mrb[0].mxu0
    %v1184 = vadd.f32 %v172, %v1183
    %v1185 = vpop.f32.mrb[0].mxu0
    %v1186 = vadd.f32 %v176, %v1185
    %1187 = vdwg.mxu0
    %1188 = vmatprep.subr.bf16.mxu0 %v488
    %1189 = vmatpush1.bf16.msra.mxu0 %v487
    %1190 = vmatprep.subr.bf16.mxu0 %v496
    %1191 = vmatpush1.bf16.msra.mxu0 %v495
    %1192 = vmatprep.subr.bf16.mxu0 %v504
    %1193 = vmatpush1.bf16.msra.mxu0 %v503
    %1194 = vmatprep.subr.bf16.mxu0 %v512
    %1195 = vmatpush1.bf16.msra.mxu0 %v511
    %1196 = vmatprep.subr.bf16.mxu0 %v520
    %1197 = vmatpush1.bf16.msra.mxu0 %v519
    %1198 = vmatprep.subr.bf16.mxu0 %v528
    %1199 = vmatpush1.bf16.msra.mxu0 %v527
    %1200 = vmatprep.subr.bf16.mxu0 %v536
    %1201 = vmatpush1.bf16.msra.mxu0 %v535
    %1202 = vmatprep.subr.bf16.mxu0 %v544
    %1203 = vmatpush1.bf16.msra.mxu0 %v543
    %1204 = vmatprep.subr.bf16.mxu0 0
    %1205 = vmatpush1.bf16.msra.mxu0 0
    %1206 = vmatprep.subr.bf16.mxu0 0
    %1207 = vmatpush1.bf16.msra.mxu0 0
    %1208 = vmatprep.subr.bf16.mxu0 0
    %1209 = vmatpush1.bf16.msra.mxu0 0
    %1210 = vmatprep.subr.bf16.mxu0 0
    %1211 = vmatpush1.bf16.msra.mxu0 0
    %1212 = vmatprep.subr.bf16.mxu0 0
    %1213 = vmatpush1.bf16.msra.mxu0 0
    %1214 = vmatprep.subr.bf16.mxu0 0
    %1215 = vmatpush1.bf16.msra.mxu0 0
    %1216 = vmatprep.subr.bf16.mxu0 0
    %1217 = vmatpush1.bf16.msra.mxu0 0
    %1218 = vmatprep.subr.bf16.mxu0 0
    %1219 = vmatpush1.bf16.msra.mxu0 0
    %1220 = vmatprep.mubr.bf16.mxu0 0
    %1221 = vmatmul.mubr.bf16.gmra.mrb[0].mxu0 %v257
    %v1222 = vpop.f32.mrb[0].mxu0
    %v1223 = vadd.f32 %v180, %v1222
    %v1224 = vpop.f32.mrb[0].mxu0
    %v1225 = vadd.f32 %v184, %v1224
    %v1226 = vpop.f32.mrb[0].mxu0
    %v1227 = vadd.f32 %v180, %v1226
    %v1228 = vpop.f32.mrb[0].mxu0
    %v1229 = vadd.f32 %v184, %v1228
    %1230 = vmatprep.mubr.bf16.mxu0 0
    %1231 = vmatmul.mubr.bf16.gmra.mrb[0].mxu0 %v258
    %v1232 = vpop.f32.mrb[0].mxu0
    %v1233 = vadd.f32 %v180, %v1232
    %v1234 = vpop.f32.mrb[0].mxu0
    %v1235 = vadd.f32 %v184, %v1234
    %v1236 = vpop.f32.mrb[0].mxu0
    %v1237 = vadd.f32 %v180, %v1236
    %v1238 = vpop.f32.mrb[0].mxu0
    %v1239 = vadd.f32 %v184, %v1238
    %1240 = vmatprep.mubr.bf16.mxu0 0
    %1241 = vmatmul.mubr.bf16.gmra.mrb[0].mxu0 %v259
    %v1242 = vpop.f32.mrb[0].mxu0
    %v1243 = vadd.f32 %v180, %v1242
    %v1244 = vpop.f32.mrb[0].mxu0
    %v1245 = vadd.f32 %v184, %v1244
    %v1246 = vpop.f32.mrb[0].mxu0
    %v1247 = vadd.f32 %v180, %v1246
    %v1248 = vpop.f32.mrb[0].mxu0
    %v1249 = vadd.f32 %v184, %v1248
    %1250 = vmatprep.mubr.bf16.mxu0 0
    %1251 = vmatmul.mubr.bf16.gmra.mrb[0].mxu0 %v260
    %v1252 = vpop.f32.mrb[0].mxu0
    %v1253 = vadd.f32 %v180, %v1252
    %v1254 = vpop.f32.mrb[0].mxu0
    %v1255 = vadd.f32 %v184, %v1254
    %v1256 = vpop.f32.mrb[0].mxu0
    %v1257 = vadd.f32 %v180, %v1256
    %v1258 = vpop.f32.mrb[0].mxu0
    %v1259 = vadd.f32 %v184, %v1258
    %1260 = vmatprep.mubr.bf16.mxu0 0
    %1261 = vmatmul.mubr.bf16.gmra.mrb[0].mxu0 %v261
    %v1262 = vpop.f32.mrb[0].mxu0
    %v1263 = vadd.f32 %v180, %v1262
    %v1264 = vpop.f32.mrb[0].mxu0
    %v1265 = vadd.f32 %v184, %v1264
    %v1266 = vpop.f32.mrb[0].mxu0
    %v1267 = vadd.f32 %v180, %v1266
    %v1268 = vpop.f32.mrb[0].mxu0
    %v1269 = vadd.f32 %v184, %v1268
    %1270 = vmatprep.mubr.bf16.mxu0 0
    %1271 = vmatmul.mubr.bf16.gmra.mrb[0].mxu0 %v262
    %v1272 = vpop.f32.mrb[0].mxu0
    %v1273 = vadd.f32 %v180, %v1272
    %v1274 = vpop.f32.mrb[0].mxu0
    %v1275 = vadd.f32 %v184, %v1274
    %v1276 = vpop.f32.mrb[0].mxu0
    %v1277 = vadd.f32 %v180, %v1276
    %v1278 = vpop.f32.mrb[0].mxu0
    %v1279 = vadd.f32 %v184, %v1278
    %1280 = vmatprep.mubr.bf16.mxu0 0
    %1281 = vmatmul.mubr.bf16.gmra.mrb[0].mxu0 %v263
    %v1282 = vpop.f32.mrb[0].mxu0
    %v1283 = vadd.f32 %v180, %v1282
    %v1284 = vpop.f32.mrb[0].mxu0
    %v1285 = vadd.f32 %v184, %v1284
    %v1286 = vpop.f32.mrb[0].mxu0
    %v1287 = vadd.f32 %v180, %v1286
    %v1288 = vpop.f32.mrb[0].mxu0
    %v1289 = vadd.f32 %v184, %v1288
    %1290 = vmatprep.mubr.bf16.mxu0 0
    %1291 = vmatmul.mubr.bf16.gmra.mrb[0].mxu0 %v264
    %v1292 = vpop.f32.mrb[0].mxu0
    %v1293 = vadd.f32 %v180, %v1292
    %v1294 = vpop.f32.mrb[0].mxu0
    %v1295 = vadd.f32 %v184, %v1294
    %v1296 = vpop.f32.mrb[0].mxu0
    %v1297 = vadd.f32 %v180, %v1296
    %v1298 = vpop.f32.mrb[0].mxu0
    %v1299 = vadd.f32 %v184, %v1298
    %1300 = vmatprep.mubr.bf16.mxu0 0
    %1301 = vmatmul.mubr.bf16.gmra.mrb[0].mxu0 %v265
    %v1302 = vpop.f32.mrb[0].mxu0
    %v1303 = vadd.f32 %v180, %v1302
    %v1304 = vpop.f32.mrb[0].mxu0
    %v1305 = vadd.f32 %v184, %v1304
    %v1306 = vpop.f32.mrb[0].mxu0
    %v1307 = vadd.f32 %v180, %v1306
    %v1308 = vpop.f32.mrb[0].mxu0
    %v1309 = vadd.f32 %v184, %v1308
    %1310 = vmatprep.mubr.bf16.mxu0 0
    %1311 = vmatmul.mubr.bf16.gmra.mrb[0].mxu0 %v266
    %v1312 = vpop.f32.mrb[0].mxu0
    %v1313 = vadd.f32 %v180, %v1312
    %v1314 = vpop.f32.mrb[0].mxu0
    %v1315 = vadd.f32 %v184, %v1314
    %v1316 = vpop.f32.mrb[0].mxu0
    %v1317 = vadd.f32 %v180, %v1316
    %v1318 = vpop.f32.mrb[0].mxu0
    %v1319 = vadd.f32 %v184, %v1318
    %1320 = vmatprep.mubr.bf16.mxu0 0
    %1321 = vmatmul.mubr.bf16.gmra.mrb[0].mxu0 %v267
    %v1322 = vpop.f32.mrb[0].mxu0
    %v1323 = vadd.f32 %v180, %v1322
    %v1324 = vpop.f32.mrb[0].mxu0
    %v1325 = vadd.f32 %v184, %v1324
    %v1326 = vpop.f32.mrb[0].mxu0
    %v1327 = vadd.f32 %v180, %v1326
    %v1328 = vpop.f32.mrb[0].mxu0
    %v1329 = vadd.f32 %v184, %v1328
    %1330 = vmatprep.mubr.bf16.mxu0 0
    %1331 = vmatmul.mubr.bf16.gmra.mrb[0].mxu0 %v268
    %v1332 = vpop.f32.mrb[0].mxu0
    %v1333 = vadd.f32 %v180, %v1332
    %v1334 = vpop.f32.mrb[0].mxu0
    %v1335 = vadd.f32 %v184, %v1334
    %v1336 = vpop.f32.mrb[0].mxu0
    %v1337 = vadd.f32 %v180, %v1336
    %v1338 = vpop.f32.mrb[0].mxu0
    %v1339 = vadd.f32 %v184, %v1338
    %1340 = vmatprep.mubr.bf16.mxu0 0
    %1341 = vmatmul.mubr.bf16.gmra.mrb[0].mxu0 %v269
    %v1342 = vpop.f32.mrb[0].mxu0
    %v1343 = vadd.f32 %v180, %v1342
    %v1344 = vpop.f32.mrb[0].mxu0
    %v1345 = vadd.f32 %v184, %v1344
    %v1346 = vpop.f32.mrb[0].mxu0
    %v1347 = vadd.f32 %v180, %v1346
    %v1348 = vpop.f32.mrb[0].mxu0
    %v1349 = vadd.f32 %v184, %v1348
    %1350 = vmatprep.mubr.bf16.mxu0 0
    %1351 = vmatmul.mubr.bf16.gmra.mrb[0].mxu0 %v270
    %v1352 = vpop.f32.mrb[0].mxu0
    %v1353 = vadd.f32 %v180, %v1352
    %v1354 = vpop.f32.mrb[0].mxu0
    %v1355 = vadd.f32 %v184, %v1354
    %v1356 = vpop.f32.mrb[0].mxu0
    %v1357 = vadd.f32 %v180, %v1356
    %v1358 = vpop.f32.mrb[0].mxu0
    %v1359 = vadd.f32 %v184, %v1358
    %1360 = vmatprep.mubr.bf16.mxu0 0
    %1361 = vmatmul.mubr.bf16.gmra.mrb[0].mxu0 %v271
    %v1362 = vpop.f32.mrb[0].mxu0
    %v1363 = vadd.f32 %v180, %v1362
    %v1364 = vpop.f32.mrb[0].mxu0
    %v1365 = vadd.f32 %v184, %v1364
    %v1366 = vpop.f32.mrb[0].mxu0
    %v1367 = vadd.f32 %v180, %v1366
    %v1368 = vpop.f32.mrb[0].mxu0
    %v1369 = vadd.f32 %v184, %v1368
    %1370 = vmatprep.mubr.bf16.mxu0 0
    %1371 = vmatmul.mubr.bf16.gmra.mrb[0].mxu0 %v272
    %v1372 = vpop.f32.mrb[0].mxu0
    %v1373 = vadd.f32 %v180, %v1372
    %v1374 = vpop.f32.mrb[0].mxu0
    %v1375 = vadd.f32 %v184, %v1374
    %v1376 = vpop.f32.mrb[0].mxu0
    %v1377 = vadd.f32 %v180, %v1376
    %v1378 = vpop.f32.mrb[0].mxu0
    %v1379 = vadd.f32 %v184, %v1378
    %1380 = vdwg.mxu0
    %1381 = vst [vmem:[#allocation8] sm:$0xff] %v644
    %1382 = vst [vmem:[#allocation8 + $0x8] sm:$0xff] %v646
    %1383 = vst [vmem:[#allocation8 + $0x10] sm:$0xff] %v837
    %1384 = vst [vmem:[#allocation8 + $0x18] sm:$0xff] %v839
    %1385 = vst [vmem:[#allocation8 + $0x20] sm:$0xff] %v1030
    %1386 = vst [vmem:[#allocation8 + $0x28] sm:$0xff] %v1032
    %1387 = vst [vmem:[#allocation8 + $0x30] sm:$0xff] %v1223
    %1388 = vst [vmem:[#allocation8 + $0x38] sm:$0xff] %v1225
    %1389 = vst [vmem:[#allocation8 + $0x40] sm:$0xff] %v648
    %1390 = vst [vmem:[#allocation8 + $0x48] sm:$0xff] %v650
    %1391 = vst [vmem:[#allocation8 + $0x50] sm:$0xff] %v841
    %1392 = vst [vmem:[#allocation8 + $0x58] sm:$0xff] %v843
    %1393 = vst [vmem:[#allocation8 + $0x60] sm:$0xff] %v1034
    %1394 = vst [vmem:[#allocation8 + $0x68] sm:$0xff] %v1036
    %1395 = vst [vmem:[#allocation8 + $0x70] sm:$0xff] %v1227
    %1396 = vst [vmem:[#allocation8 + $0x78] sm:$0xff] %v1229
    %1397 = vst [vmem:[#allocation8 + $0x80] sm:$0xff] %v654
    %1398 = vst [vmem:[#allocation8 + $0x88] sm:$0xff] %v656
    %1399 = vst [vmem:[#allocation8 + $0x90] sm:$0xff] %v847
    %1400 = vst [vmem:[#allocation8 + $0x98] sm:$0xff] %v849
    %1401 = vst [vmem:[#allocation8 + $0xa0] sm:$0xff] %v1040
    %1402 = vst [vmem:[#allocation8 + $0xa8] sm:$0xff] %v1042
    %1403 = vst [vmem:[#allocation8 + $0xb0] sm:$0xff] %v1233
    %1404 = vst [vmem:[#allocation8 + $0xb8] sm:$0xff] %v1235
    %1405 = vst [vmem:[#allocation8 + $0xc0] sm:$0xff] %v658
    %1406 = vst [vmem:[#allocation8 + $0xc8] sm:$0xff] %v660
    %1407 = vst [vmem:[#allocation8 + $0xd0] sm:$0xff] %v851
    %1408 = vst [vmem:[#allocation8 + $0xd8] sm:$0xff] %v853
    %1409 = vst [vmem:[#allocation8 + $0xe0] sm:$0xff] %v1044
    %1410 = vst [vmem:[#allocation8 + $0xe8] sm:$0xff] %v1046
    %1411 = vst [vmem:[#allocation8 + $0xf0] sm:$0xff] %v1237
    %1412 = vst [vmem:[#allocation8 + $0xf8] sm:$0xff] %v1239
    %1413 = vst [vmem:[#allocation8 + $0x100] sm:$0xff] %v664
    %1414 = vst [vmem:[#allocation8 + $0x108] sm:$0xff] %v666
    %1415 = vst [vmem:[#allocation8 + $0x110] sm:$0xff] %v857
    %1416 = vst [vmem:[#allocation8 + $0x118] sm:$0xff] %v859
    %1417 = vst [vmem:[#allocation8 + $0x120] sm:$0xff] %v1050
    %1418 = vst [vmem:[#allocation8 + $0x128] sm:$0xff] %v1052
    %1419 = vst [vmem:[#allocation8 + $0x130] sm:$0xff] %v1243
    %1420 = vst [vmem:[#allocation8 + $0x138] sm:$0xff] %v1245
    %1421 = vst [vmem:[#allocation8 + $0x140] sm:$0xff] %v668
    %1422 = vst [vmem:[#allocation8 + $0x148] sm:$0xff] %v670
    %1423 = vst [vmem:[#allocation8 + $0x150] sm:$0xff] %v861
    %1424 = vst [vmem:[#allocation8 + $0x158] sm:$0xff] %v863
    %1425 = vst [vmem:[#allocation8 + $0x160] sm:$0xff] %v1054
    %1426 = vst [vmem:[#allocation8 + $0x168] sm:$0xff] %v1056
    %1427 = vst [vmem:[#allocation8 + $0x170] sm:$0xff] %v1247
    %1428 = vst [vmem:[#allocation8 + $0x178] sm:$0xff] %v1249
    %1429 = vst [vmem:[#allocation8 + $0x180] sm:$0xff] %v674
    %1430 = vst [vmem:[#allocation8 + $0x188] sm:$0xff] %v676
    %1431 = vst [vmem:[#allocation8 + $0x190] sm:$0xff] %v867
    %1432 = vst [vmem:[#allocation8 + $0x198] sm:$0xff] %v869
    %1433 = vst [vmem:[#allocation8 + $0x1a0] sm:$0xff] %v1060
    %1434 = vst [vmem:[#allocation8 + $0x1a8] sm:$0xff] %v1062
    %1435 = vst [vmem:[#allocation8 + $0x1b0] sm:$0xff] %v1253
    %1436 = vst [vmem:[#allocation8 + $0x1b8] sm:$0xff] %v1255
    %1437 = vst [vmem:[#allocation8 + $0x1c0] sm:$0xff] %v678
    %1438 = vst [vmem:[#allocation8 + $0x1c8] sm:$0xff] %v680
    %1439 = vst [vmem:[#allocation8 + $0x1d0] sm:$0xff] %v871
    %1440 = vst [vmem:[#allocation8 + $0x1d8] sm:$0xff] %v873
    %1441 = vst [vmem:[#allocation8 + $0x1e0] sm:$0xff] %v1064
    %1442 = vst [vmem:[#allocation8 + $0x1e8] sm:$0xff] %v1066
    %1443 = vst [vmem:[#allocation8 + $0x1f0] sm:$0xff] %v1257
    %1444 = vst [vmem:[#allocation8 + $0x1f8] sm:$0xff] %v1259
    %1445 = vst [vmem:[#allocation8 + $0x200] sm:$0xff] %v684
    %1446 = vst [vmem:[#allocation8 + $0x208] sm:$0xff] %v686
    %1447 = vst [vmem:[#allocation8 + $0x210] sm:$0xff] %v877
    %1448 = vst [vmem:[#allocation8 + $0x218] sm:$0xff] %v879
    %1449 = vst [vmem:[#allocation8 + $0x220] sm:$0xff] %v1070
    %1450 = vst [vmem:[#allocation8 + $0x228] sm:$0xff] %v1072
    %1451 = vst [vmem:[#allocation8 + $0x230] sm:$0xff] %v1263
    %1452 = vst [vmem:[#allocation8 + $0x238] sm:$0xff] %v1265
    %1453 = vst [vmem:[#allocation8 + $0x240] sm:$0xff] %v688
    %1454 = vst [vmem:[#allocation8 + $0x248] sm:$0xff] %v690
    %1455 = vst [vmem:[#allocation8 + $0x250] sm:$0xff] %v881
    %1456 = vst [vmem:[#allocation8 + $0x258] sm:$0xff] %v883
    %1457 = vst [vmem:[#allocation8 + $0x260] sm:$0xff] %v1074
    %1458 = vst [vmem:[#allocation8 + $0x268] sm:$0xff] %v1076
    %1459 = vst [vmem:[#allocation8 + $0x270] sm:$0xff] %v1267
    %1460 = vst [vmem:[#allocation8 + $0x278] sm:$0xff] %v1269
    %1461 = vst [vmem:[#allocation8 + $0x280] sm:$0xff] %v694
    %1462 = vst [vmem:[#allocation8 + $0x288] sm:$0xff] %v696
    %1463 = vst [vmem:[#allocation8 + $0x290] sm:$0xff] %v887
    %1464 = vst [vmem:[#allocation8 + $0x298] sm:$0xff] %v889
    %1465 = vst [vmem:[#allocation8 + $0x2a0] sm:$0xff] %v1080
    %1466 = vst [vmem:[#allocation8 + $0x2a8] sm:$0xff] %v1082
    %1467 = vst [vmem:[#allocation8 + $0x2b0] sm:$0xff] %v1273
    %1468 = vst [vmem:[#allocation8 + $0x2b8] sm:$0xff] %v1275
    %1469 = vst [vmem:[#allocation8 + $0x2c0] sm:$0xff] %v698
    %1470 = vst [vmem:[#allocation8 + $0x2c8] sm:$0xff] %v700
    %1471 = vst [vmem:[#allocation8 + $0x2d0] sm:$0xff] %v891
    %1472 = vst [vmem:[#allocation8 + $0x2d8] sm:$0xff] %v893
    %1473 = vst [vmem:[#allocation8 + $0x2e0] sm:$0xff] %v1084
    %1474 = vst [vmem:[#allocation8 + $0x2e8] sm:$0xff] %v1086
    %1475 = vst [vmem:[#allocation8 + $0x2f0] sm:$0xff] %v1277
    %1476 = vst [vmem:[#allocation8 + $0x2f8] sm:$0xff] %v1279
    %1477 = vst [vmem:[#allocation8 + $0x300] sm:$0xff] %v704
    %1478 = vst [vmem:[#allocation8 + $0x308] sm:$0xff] %v706
    %1479 = vst [vmem:[#allocation8 + $0x310] sm:$0xff] %v897
    %1480 = vst [vmem:[#allocation8 + $0x318] sm:$0xff] %v899
    %1481 = vst [vmem:[#allocation8 + $0x320] sm:$0xff] %v1090
    %1482 = vst [vmem:[#allocation8 + $0x328] sm:$0xff] %v1092
    %1483 = vst [vmem:[#allocation8 + $0x330] sm:$0xff] %v1283
    %1484 = vst [vmem:[#allocation8 + $0x338] sm:$0xff] %v1285
    %1485 = vst [vmem:[#allocation8 + $0x340] sm:$0xff] %v708
    %1486 = vst [vmem:[#allocation8 + $0x348] sm:$0xff] %v710
    %1487 = vst [vmem:[#allocation8 + $0x350] sm:$0xff] %v901
    %1488 = vst [vmem:[#allocation8 + $0x358] sm:$0xff] %v903
    %1489 = vst [vmem:[#allocation8 + $0x360] sm:$0xff] %v1094
    %1490 = vst [vmem:[#allocation8 + $0x368] sm:$0xff] %v1096
    %1491 = vst [vmem:[#allocation8 + $0x370] sm:$0xff] %v1287
    %1492 = vst [vmem:[#allocation8 + $0x378] sm:$0xff] %v1289
    %1493 = vst [vmem:[#allocation8 + $0x380] sm:$0xff] %v714
    %1494 = vst [vmem:[#allocation8 + $0x388] sm:$0xff] %v716
    %1495 = vst [vmem:[#allocation8 + $0x390] sm:$0xff] %v907
    %1496 = vst [vmem:[#allocation8 + $0x398] sm:$0xff] %v909
    %1497 = vst [vmem:[#allocation8 + $0x3a0] sm:$0xff] %v1100
    %1498 = vst [vmem:[#allocation8 + $0x3a8] sm:$0xff] %v1102
    %1499 = vst [vmem:[#allocation8 + $0x3b0] sm:$0xff] %v1293
    %1500 = vst [vmem:[#allocation8 + $0x3b8] sm:$0xff] %v1295
    %1501 = vst [vmem:[#allocation8 + $0x3c0] sm:$0xff] %v718
    %1502 = vst [vmem:[#allocation8 + $0x3c8] sm:$0xff] %v720
    %1503 = vst [vmem:[#allocation8 + $0x3d0] sm:$0xff] %v911
    %1504 = vst [vmem:[#allocation8 + $0x3d8] sm:$0xff] %v913
    %1505 = vst [vmem:[#allocation8 + $0x3e0] sm:$0xff] %v1104
    %1506 = vst [vmem:[#allocation8 + $0x3e8] sm:$0xff] %v1106
    %1507 = vst [vmem:[#allocation8 + $0x3f0] sm:$0xff] %v1297
    %1508 = vst [vmem:[#allocation8 + $0x3f8] sm:$0xff] %v1299
    %1509 = vst [vmem:[#allocation8 + $0x400] sm:$0xff] %v724
    %1510 = vst [vmem:[#allocation8 + $0x408] sm:$0xff] %v726
    %1511 = vst [vmem:[#allocation8 + $0x410] sm:$0xff] %v917
    %1512 = vst [vmem:[#allocation8 + $0x418] sm:$0xff] %v919
    %1513 = vst [vmem:[#allocation8 + $0x420] sm:$0xff] %v1110
    %1514 = vst [vmem:[#allocation8 + $0x428] sm:$0xff] %v1112
    %1515 = vst [vmem:[#allocation8 + $0x430] sm:$0xff] %v1303
    %1516 = vst [vmem:[#allocation8 + $0x438] sm:$0xff] %v1305
    %1517 = vst [vmem:[#allocation8 + $0x440] sm:$0xff] %v728
    %1518 = vst [vmem:[#allocation8 + $0x448] sm:$0xff] %v730
    %1519 = vst [vmem:[#allocation8 + $0x450] sm:$0xff] %v921
    %1520 = vst [vmem:[#allocation8 + $0x458] sm:$0xff] %v923
    %1521 = vst [vmem:[#allocation8 + $0x460] sm:$0xff] %v1114
    %1522 = vst [vmem:[#allocation8 + $0x468] sm:$0xff] %v1116
    %1523 = vst [vmem:[#allocation8 + $0x470] sm:$0xff] %v1307
    %1524 = vst [vmem:[#allocation8 + $0x478] sm:$0xff] %v1309
    %1525 = vst [vmem:[#allocation8 + $0x480] sm:$0xff] %v734
    %1526 = vst [vmem:[#allocation8 + $0x488] sm:$0xff] %v736
    %1527 = vst [vmem:[#allocation8 + $0x490] sm:$0xff] %v927
    %1528 = vst [vmem:[#allocation8 + $0x498] sm:$0xff] %v929
    %1529 = vst [vmem:[#allocation8 + $0x4a0] sm:$0xff] %v1120
    %1530 = vst [vmem:[#allocation8 + $0x4a8] sm:$0xff] %v1122
    %1531 = vst [vmem:[#allocation8 + $0x4b0] sm:$0xff] %v1313
    %1532 = vst [vmem:[#allocation8 + $0x4b8] sm:$0xff] %v1315
    %1533 = vst [vmem:[#allocation8 + $0x4c0] sm:$0xff] %v738
    %1534 = vst [vmem:[#allocation8 + $0x4c8] sm:$0xff] %v740
    %1535 = vst [vmem:[#allocation8 + $0x4d0] sm:$0xff] %v931
    %1536 = vst [vmem:[#allocation8 + $0x4d8] sm:$0xff] %v933
    %1537 = vst [vmem:[#allocation8 + $0x4e0] sm:$0xff] %v1124
    %1538 = vst [vmem:[#allocation8 + $0x4e8] sm:$0xff] %v1126
    %1539 = vst [vmem:[#allocation8 + $0x4f0] sm:$0xff] %v1317
    %1540 = vst [vmem:[#allocation8 + $0x4f8] sm:$0xff] %v1319
    %1541 = vst [vmem:[#allocation8 + $0x500] sm:$0xff] %v744
    %1542 = vst [vmem:[#allocation8 + $0x508] sm:$0xff] %v746
    %1543 = vst [vmem:[#allocation8 + $0x510] sm:$0xff] %v937
    %1544 = vst [vmem:[#allocation8 + $0x518] sm:$0xff] %v939
    %1545 = vst [vmem:[#allocation8 + $0x520] sm:$0xff] %v1130
    %1546 = vst [vmem:[#allocation8 + $0x528] sm:$0xff] %v1132
    %1547 = vst [vmem:[#allocation8 + $0x530] sm:$0xff] %v1323
    %1548 = vst [vmem:[#allocation8 + $0x538] sm:$0xff] %v1325
    %1549 = vst [vmem:[#allocation8 + $0x540] sm:$0xff] %v748
    %1550 = vst [vmem:[#allocation8 + $0x548] sm:$0xff] %v750
    %1551 = vst [vmem:[#allocation8 + $0x550] sm:$0xff] %v941
    %1552 = vst [vmem:[#allocation8 + $0x558] sm:$0xff] %v943
    %1553 = vst [vmem:[#allocation8 + $0x560] sm:$0xff] %v1134
    %1554 = vst [vmem:[#allocation8 + $0x568] sm:$0xff] %v1136
    %1555 = vst [vmem:[#allocation8 + $0x570] sm:$0xff] %v1327
    %1556 = vst [vmem:[#allocation8 + $0x578] sm:$0xff] %v1329
    %1557 = vst [vmem:[#allocation8 + $0x580] sm:$0xff] %v754
    %1558 = vst [vmem:[#allocation8 + $0x588] sm:$0xff] %v756
    %1559 = vst [vmem:[#allocation8 + $0x590] sm:$0xff] %v947
    %1560 = vst [vmem:[#allocation8 + $0x598] sm:$0xff] %v949
    %1561 = vst [vmem:[#allocation8 + $0x5a0] sm:$0xff] %v1140
    %1562 = vst [vmem:[#allocation8 + $0x5a8] sm:$0xff] %v1142
    %1563 = vst [vmem:[#allocation8 + $0x5b0] sm:$0xff] %v1333
    %1564 = vst [vmem:[#allocation8 + $0x5b8] sm:$0xff] %v1335
    %1565 = vst [vmem:[#allocation8 + $0x5c0] sm:$0xff] %v758
    %1566 = vst [vmem:[#allocation8 + $0x5c8] sm:$0xff] %v760
    %1567 = vst [vmem:[#allocation8 + $0x5d0] sm:$0xff] %v951
    %1568 = vst [vmem:[#allocation8 + $0x5d8] sm:$0xff] %v953
    %1569 = vst [vmem:[#allocation8 + $0x5e0] sm:$0xff] %v1144
    %1570 = vst [vmem:[#allocation8 + $0x5e8] sm:$0xff] %v1146
    %1571 = vst [vmem:[#allocation8 + $0x5f0] sm:$0xff] %v1337
    %1572 = vst [vmem:[#allocation8 + $0x5f8] sm:$0xff] %v1339
    %1573 = vst [vmem:[#allocation8 + $0x600] sm:$0xff] %v764
    %1574 = vst [vmem:[#allocation8 + $0x608] sm:$0xff] %v766
    %1575 = vst [vmem:[#allocation8 + $0x610] sm:$0xff] %v957
    %1576 = vst [vmem:[#allocation8 + $0x618] sm:$0xff] %v959
    %1577 = vst [vmem:[#allocation8 + $0x620] sm:$0xff] %v1150
    %1578 = vst [vmem:[#allocation8 + $0x628] sm:$0xff] %v1152
    %1579 = vst [vmem:[#allocation8 + $0x630] sm:$0xff] %v1343
    %1580 = vst [vmem:[#allocation8 + $0x638] sm:$0xff] %v1345
    %1581 = vst [vmem:[#allocation8 + $0x640] sm:$0xff] %v768
    %1582 = vst [vmem:[#allocation8 + $0x648] sm:$0xff] %v770
    %1583 = vst [vmem:[#allocation8 + $0x650] sm:$0xff] %v961
    %1584 = vst [vmem:[#allocation8 + $0x658] sm:$0xff] %v963
    %1585 = vst [vmem:[#allocation8 + $0x660] sm:$0xff] %v1154
    %1586 = vst [vmem:[#allocation8 + $0x668] sm:$0xff] %v1156
    %1587 = vst [vmem:[#allocation8 + $0x670] sm:$0xff] %v1347
    %1588 = vst [vmem:[#allocation8 + $0x678] sm:$0xff] %v1349
    %1589 = vst [vmem:[#allocation8 + $0x680] sm:$0xff] %v774
    %1590 = vst [vmem:[#allocation8 + $0x688] sm:$0xff] %v776
    %1591 = vst [vmem:[#allocation8 + $0x690] sm:$0xff] %v967
    %1592 = vst [vmem:[#allocation8 + $0x698] sm:$0xff] %v969
    %1593 = vst [vmem:[#allocation8 + $0x6a0] sm:$0xff] %v1160
    %1594 = vst [vmem:[#allocation8 + $0x6a8] sm:$0xff] %v1162
    %1595 = vst [vmem:[#allocation8 + $0x6b0] sm:$0xff] %v1353
    %1596 = vst [vmem:[#allocation8 + $0x6b8] sm:$0xff] %v1355
    %1597 = vst [vmem:[#allocation8 + $0x6c0] sm:$0xff] %v778
    %1598 = vst [vmem:[#allocation8 + $0x6c8] sm:$0xff] %v780
    %1599 = vst [vmem:[#allocation8 + $0x6d0] sm:$0xff] %v971
    %1600 = vst [vmem:[#allocation8 + $0x6d8] sm:$0xff] %v973
    %1601 = vst [vmem:[#allocation8 + $0x6e0] sm:$0xff] %v1164
    %1602 = vst [vmem:[#allocation8 + $0x6e8] sm:$0xff] %v1166
    %1603 = vst [vmem:[#allocation8 + $0x6f0] sm:$0xff] %v1357
    %1604 = vst [vmem:[#allocation8 + $0x6f8] sm:$0xff] %v1359
    %1605 = vst [vmem:[#allocation8 + $0x700] sm:$0xff] %v784
    %1606 = vst [vmem:[#allocation8 + $0x708] sm:$0xff] %v786
    %1607 = vst [vmem:[#allocation8 + $0x710] sm:$0xff] %v977
    %1608 = vst [vmem:[#allocation8 + $0x718] sm:$0xff] %v979
    %1609 = vst [vmem:[#allocation8 + $0x720] sm:$0xff] %v1170
    %1610 = vst [vmem:[#allocation8 + $0x728] sm:$0xff] %v1172
    %1611 = vst [vmem:[#allocation8 + $0x730] sm:$0xff] %v1363
    %1612 = vst [vmem:[#allocation8 + $0x738] sm:$0xff] %v1365
    %1613 = vst [vmem:[#allocation8 + $0x740] sm:$0xff] %v788
    %1614 = vst [vmem:[#allocation8 + $0x748] sm:$0xff] %v790
    %1615 = vst [vmem:[#allocation8 + $0x750] sm:$0xff] %v981
    %1616 = vst [vmem:[#allocation8 + $0x758] sm:$0xff] %v983
    %1617 = vst [vmem:[#allocation8 + $0x760] sm:$0xff] %v1174
    %1618 = vst [vmem:[#allocation8 + $0x768] sm:$0xff] %v1176
    %1619 = vst [vmem:[#allocation8 + $0x770] sm:$0xff] %v1367
    %1620 = vst [vmem:[#allocation8 + $0x778] sm:$0xff] %v1369
    %1621 = vst [vmem:[#allocation8 + $0x780] sm:$0xff] %v794
    %1622 = vst [vmem:[#allocation8 + $0x788] sm:$0xff] %v796
    %1623 = vst [vmem:[#allocation8 + $0x790] sm:$0xff] %v987
    %1624 = vst [vmem:[#allocation8 + $0x798] sm:$0xff] %v989
    %1625 = vst [vmem:[#allocation8 + $0x7a0] sm:$0xff] %v1180
    %1626 = vst [vmem:[#allocation8 + $0x7a8] sm:$0xff] %v1182
    %1627 = vst [vmem:[#allocation8 + $0x7b0] sm:$0xff] %v1373
    %1628 = vst [vmem:[#allocation8 + $0x7b8] sm:$0xff] %v1375
    %1629 = vst [vmem:[#allocation8 + $0x7c0] sm:$0xff] %v798
    %1630 = vst [vmem:[#allocation8 + $0x7c8] sm:$0xff] %v800
    %1631 = vst [vmem:[#allocation8 + $0x7d0] sm:$0xff] %v991
    %1632 = vst [vmem:[#allocation8 + $0x7d8] sm:$0xff] %v993
    %1633 = vst [vmem:[#allocation8 + $0x7e0] sm:$0xff] %v1184
    %1634 = vst [vmem:[#allocation8 + $0x7e8] sm:$0xff] %v1186
    %1635 = vst [vmem:[#allocation8 + $0x7f0] sm:$0xff] %v1377
    %1636 = vst [vmem:[#allocation8 + $0x7f8] sm:$0xff] %v1379
    // Predicated region
    $region26: #{tpu_custom_call.1} parent=1 // pred_check
      _
    $region27: #{tpu_custom_call.1} parent=1 // pred_check_branch
      %1638 = sbr.rel (0) target = $region29
    $region28: #{tpu_custom_call.1} parent=1 // pred_region
      %s1640 = ssub.s32 32768, 32768
      %1641 = vsyncadd [#allocation4], %s1640
      %s1642 = sshll.u32 [#allocation8], 4
      %s1643 = int_to_ptr.vmem [resolvable:$true] %s1642
      %1648 = dma.vmem_to_hbm [thread:$0]  %s1643, 32768, %s3, [#allocation4], 1024, 1024, 64
    $region29: #{tpu_custom_call.1} parent=1 // pred_fallthru
      _
    // Predicated region
    $region30: #{tpu_custom_call.1} parent=1 // pred_check
      _
    $region31: #{tpu_custom_call.1} parent=1 // pred_check_branch
      %1650 = sbr.rel (0) target = $region33
    $region32: #{tpu_custom_call.1} parent=1 // pred_region
      %1651 = dma.done [#allocation4], 32768
    $region33: #{tpu_custom_call.1} parent=1 // pred_fallthru
      _
    %1652 = vsyncpa [#allocation3], 1
    %1653 = vsyncpa [#allocation6], 1
    %1654 = vsyncpa [#allocation4], 1

</llo_original>
